<compile_context>
chip_gen: v7x
topology: tpu7x:2x2x1
jax: 0.10.0
libtpu: 0.0.40
codegen_flags: <defaults>
</compile_context>

<pallas_src>
import functools

import jax
import jax.numpy as jnp
import numpy as np
from jax.experimental import pallas as pl
from jax.experimental.pallas import tpu as pltpu


# ----------------------------- Pallas kernels ------------------------------ #

def _conv_acc(x_ref, top_ref, bot_ref, w_ref, *, win, thw, tcg):
    """Phase-merged 3x3 conv at SOURCE resolution for one (row-tile, channel
    group).  Builds the 9 taps in VMEM from the tile + 1-row halos (lane
    slices/concats + edge masks) and accumulates 9 MXU matmuls in f32."""
    x = x_ref[0]            # (Cin, THW)  flattened (row, col) tile, HW on lanes
    top = top_ref[0, 0]     # (Cin, Win)  source row just above the tile (or 0)
    bot = bot_ref[0, 0]     # (Cin, Win)  source row just below the tile (or 0)

    lane = jax.lax.broadcasted_iota(jnp.int32, (1, thw), 1)
    col = lane % win
    at_left = col == 0
    at_right = col == win - 1

    acc = jnp.zeros((tcg, thw), jnp.float32)
    for a in range(3):                      # source-row offset a-1
        if a == 0:
            base = top if thw == win else jnp.concatenate(
                [top, x[:, :thw - win]], axis=-1)
        elif a == 1:
            base = x
        else:
            base = bot if thw == win else jnp.concatenate(
                [x[:, win:], bot], axis=-1)
        for b in range(3):                  # source-col offset b-1
            if b == 0:
                tap = jnp.concatenate([base[:, :1], base[:, :thw - 1]], axis=-1)
                tap = jnp.where(at_left, 0.0, tap)
            elif b == 1:
                tap = base
            else:
                tap = jnp.concatenate([base[:, 1:], base[:, thw - 1:]], axis=-1)
                tap = jnp.where(at_right, 0.0, tap)
            acc = acc + jnp.dot(w_ref[a, b], tap,
                                preferred_element_type=jnp.float32)
    return acc


def _stats_kernel(x_ref, top_ref, bot_ref, w_ref, s_ref, q_ref,
                  *, win, thw, tcg):
    # Emits only the per-tile partial BN statistics; conv output never hits HBM.
    acc = _conv_acc(x_ref, top_ref, bot_ref, w_ref, win=win, thw=thw, tcg=tcg)
    s_ref[0, 0, 0] = jnp.sum(acc, axis=-1, keepdims=True)
    q_ref[0, 0, 0] = jnp.sum(acc * acc, axis=-1, keepdims=True)


def _out_kernel(x_ref, top_ref, bot_ref, w_ref, scale_ref, shift_ref, o_ref,
                *, win, thw, tcg):
    # Recompute the conv (mem-bound; MXU has plenty of headroom) and fuse the
    # BN affine + ReLU so the only HBM write is the final activation.
    acc = _conv_acc(x_ref, top_ref, bot_ref, w_ref, win=win, thw=thw, tcg=tcg)
    o_ref[0] = jnp.maximum(acc * scale_ref[...] + shift_ref[...], 0.0)


# ------------------------------- Planning ---------------------------------- #

def _vmem_capacity_bytes():
    try:
        cap = int(pltpu.get_tpu_info().vmem_capacity_bytes)
        if cap > 0:
            return cap
    except Exception:
        pass
    return 64 * 1024 * 1024   # conservative (v7x per-core VMEM)


def _plan_tiles(n, hin, win, cin, c4, budget_bytes):
    """Pick the row-tile TH (divisor of Hin, TH*Win lane-aligned when possible)
    and the output-channel group TCG so one grid step fits the VMEM budget and
    there are >=2 parallel grid steps for megacore when possible."""
    def divisors(v):
        return [d for d in range(1, v + 1) if v % d == 0]

    th_opts = [d for d in divisors(hin) if (d * win) % 128 == 0]
    if not th_opts:
        # TODO(synk): zero-pad odd spatial sizes to a 128-lane multiple instead
        # of falling back to a whole-image tile.
        th_opts = [hin]
    tcg_opts = sorted({d for d in divisors(c4) if d % 8 == 0} | {c4},
                      reverse=True)

    def step_bytes(th, tcg):
        thw = th * win
        b = 2 * cin * thw * 4                # x tile (double-buffered)
        b += 4 * cin * win * 4               # halo rows
        b += 2 * 9 * tcg * cin * 4           # phase-merged weights
        b += 2 * tcg * thw * 4               # output tile (kernel 2)
        b += (2 * cin + 2 * tcg) * thw * 4   # in-kernel temps (base/tap/acc)
        return b

    best = None
    for th in sorted(th_opts, reverse=True):
        for tcg in tcg_opts:
            if step_bytes(th, tcg) <= budget_bytes:
                best = (th, tcg)
                break
        if best is not None:
            break
    if best is None:
        best = (min(th_opts), min(tcg_opts))
    th, tcg = best

    # v7x megacore: keep both TensorCores busy when the batch alone is not enough.
    if n * (hin // th) < 2:
        smaller = [d for d in th_opts
                   if d < th and step_bytes(d, tcg) <= budget_bytes]
        if smaller:
            th = max(smaller)
    return th, tcg


# ------------------------------- Wrapper ----------------------------------- #

def upconv_forward(x_nchw, w_oihw, bias, gamma, beta, eps=1e-5):
    """UpConv forward. x_nchw: (N, Cin, Hin, Win) f32 -> (N, Cout, 2Hin, 2Win)."""
    del bias  # pre-BN bias is a no-op under training-mode batch statistics.

    N, Cin, Hin, Win = x_nchw.shape
    Cout = w_oihw.shape[0]
    HW = Hin * Win
    C4 = 4 * Cout

    x = x_nchw.astype(jnp.float32)
    w = w_oihw.astype(jnp.float32)

    # --- glue: phase-merged effective weights (subpixel reformulation) ------
    # For output phase (py, px) the 3x3 conv over the nearest-x2-upsampled
    # image collapses to weights over the 3x3 SOURCE neighbourhood.
    R = jnp.array([[[1., 0., 0.], [0., 1., 1.], [0., 0., 0.]],
                   [[0., 0., 0.], [1., 1., 0.], [0., 0., 1.]]],
                  dtype=jnp.float32)                          # (phase, src_off, k)
    w_eff = jnp.einsum('pak,qbl,oikl->abpqoi', R, R, w)       # (3,3,2,2,Cout,Cin)
    w9 = w_eff.reshape(3, 3, C4, Cin)                         # row = (py*2+px)*Cout+co

    # --- planning: VMEM-aware tiles, megacore-friendly grid -----------------
    cap = _vmem_capacity_bytes()
    TH, TCG = _plan_tiles(N, Hin, Win, Cin, C4, int(0.55 * cap))
    T = Hin // TH
    G = C4 // TCG
    THW = TH * Win
    vmem_limit = int(min(0.9 * cap, 120 * 1024 * 1024))
    cparams = pltpu.CompilerParams(
        dimension_semantics=("parallel", "parallel", "arbitrary"),
        vmem_limit_bytes=vmem_limit)

    # --- glue: tiny 1-row halo arrays (2/TH of x; no 9x/3x materialization) --
    x_flat = x.reshape(N, Cin, HW)
    zero_row = jnp.zeros((N, 1, Cin, Win), jnp.float32)
    if T > 1:
        tops = jnp.transpose(x[:, :, TH - 1:Hin - 1:TH, :], (0, 2, 1, 3))
        bots = jnp.transpose(x[:, :, TH:Hin:TH, :], (0, 2, 1, 3))
        top = jnp.concatenate([zero_row, tops], axis=1)       # (N, T, Cin, Win)
        bot = jnp.concatenate([bots, zero_row], axis=1)
    else:
        top = zero_row
        bot = zero_row

    # --- Pallas kernel 1: conv recompute -> partial BN stats only -----------
    stats_kernel = functools.partial(_stats_kernel, win=Win, thw=THW, tcg=TCG)
    s, q = pl.pallas_call(
        stats_kernel,
        out_shape=(
            jax.ShapeDtypeStruct((N, T, G, TCG, 1), jnp.float32),
            jax.ShapeDtypeStruct((N, T, G, TCG, 1), jnp.float32),
        ),
        grid=(N, T, G),
        in_specs=[
            pl.BlockSpec((1, Cin, THW), lambda n, t, g: (n, 0, t)),
            pl.BlockSpec((1, 1, Cin, Win), lambda n, t, g: (n, t, 0, 0)),
            pl.BlockSpec((1, 1, Cin, Win), lambda n, t, g: (n, t, 0, 0)),
            pl.BlockSpec((3, 3, TCG, Cin), lambda n, t, g: (0, 0, g, 0)),
        ],
        out_specs=(
            pl.BlockSpec((1, 1, 1, TCG, 1), lambda n, t, g: (n, t, g, 0, 0)),
            pl.BlockSpec((1, 1, 1, TCG, 1), lambda n, t, g: (n, t, g, 0, 0)),
        ),
        compiler_params=cparams,
    )(x_flat, top, bot, w9)

    # --- glue: fold partial stats -> per-channel scale/shift (tiny) ---------
    cnt = jnp.float32(N * 4 * HW)                             # = N * 2Hin * 2Win
    s_sum = jnp.sum(s.reshape(N * T, C4), axis=0).reshape(4, Cout).sum(axis=0)
    q_sum = jnp.sum(q.reshape(N * T, C4), axis=0).reshape(4, Cout).sum(axis=0)
    mean = s_sum / cnt
    var = jnp.maximum(q_sum / cnt - mean * mean, 0.0)         # biased batch var
    inv = jax.lax.rsqrt(var + eps)
    scale = gamma.astype(jnp.float32) * inv
    shift = beta.astype(jnp.float32) - mean * scale
    scale4 = jnp.tile(scale, 4).reshape(C4, 1)
    shift4 = jnp.tile(shift, 4).reshape(C4, 1)

    # --- Pallas kernel 2: conv recompute + fused BN affine + ReLU -----------
    out_kernel = functools.partial(_out_kernel, win=Win, thw=THW, tcg=TCG)
    y = pl.pallas_call(
        out_kernel,
        out_shape=jax.ShapeDtypeStruct((N, C4, HW), jnp.float32),
        grid=(N, T, G),
        in_specs=[
            pl.BlockSpec((1, Cin, THW), lambda n, t, g: (n, 0, t)),
            pl.BlockSpec((1, 1, Cin, Win), lambda n, t, g: (n, t, 0, 0)),
            pl.BlockSpec((1, 1, Cin, Win), lambda n, t, g: (n, t, 0, 0)),
            pl.BlockSpec((3, 3, TCG, Cin), lambda n, t, g: (0, 0, g, 0)),
            pl.BlockSpec((TCG, 1), lambda n, t, g: (g, 0)),
            pl.BlockSpec((TCG, 1), lambda n, t, g: (g, 0)),
        ],
        out_specs=pl.BlockSpec((1, TCG, THW), lambda n, t, g: (n, g, t)),
        compiler_params=cparams,
    )(x_flat, top, bot, w9, scale4, shift4)

    # --- glue: pixel-shuffle phase channels back to (N, Cout, 2Hin, 2Win) ---
    # TODO(synk): fuse this px lane interleave into kernel 2's store.
    y = y.reshape(N, 2, 2, Cout, Hin, Win)                    # (n, py, px, co, i, j)
    y = jnp.transpose(y, (0, 3, 4, 1, 5, 2))                  # (n, co, i, py, j, px)
    return y.reshape(N, Cout, 2 * Hin, 2 * Win)


# ------------------------------ Reference ---------------------------------- #

def upconv_reference(x_nchw, w_oihw, bias, gamma, beta, eps=1e-5):
    x_up = jnp.repeat(jnp.repeat(x_nchw, 2, axis=2), 2, axis=3)
    y = jax.lax.conv_general_dilated(
        x_up, w_oihw, window_strides=(1, 1), padding=((1, 1), (1, 1)),
        dimension_numbers=("NCHW", "OIHW", "NCHW"))
    y = y + bias.reshape(1, -1, 1, 1)
    mean = jnp.mean(y, axis=(0, 2, 3), keepdims=True)
    var = jnp.mean((y - mean) ** 2, axis=(0, 2, 3), keepdims=True)
    y = (y - mean) * jax.lax.rsqrt(var + eps)
    y = y * gamma.reshape(1, -1, 1, 1) + beta.reshape(1, -1, 1, 1)
    return jnp.maximum(y, 0.0)


# --------------------------------- Main ------------------------------------ #

if __name__ == "__main__":
    N, Cin, Cout, Hin, Win = 2, 4, 8, 16, 16

    key = jax.random.PRNGKey(0)
    kx, kw, kb, kg, kbeta = jax.random.split(key, 5)

    x = jax.random.normal(kx, (N, Cin, Hin, Win), dtype=jnp.float32)
    fan_in = Cin * 3 * 3
    w = jax.random.normal(kw, (Cout, Cin, 3, 3), dtype=jnp.float32) / np.sqrt(fan_in)
    b = 0.1 * jax.random.normal(kb, (Cout,), dtype=jnp.float32)
    gamma = 1.0 + 0.1 * jnp.arange(Cout, dtype=jnp.float32)
    beta = 0.05 * jnp.arange(Cout, dtype=jnp.float32)

    out = upconv_forward(x, w, b, gamma, beta)
    out = jax.block_until_ready(out)

    ref = jax.block_until_ready(upconv_reference(x, w, b, gamma, beta))
    assert out.shape == (N, Cout, 2 * Hin, 2 * Win), out.shape
    np.testing.assert_allclose(np.asarray(out), np.asarray(ref),
                               atol=2e-4, rtol=2e-4)

    print("KERNEL_OK")
</pallas_src>

<mosaic_0001>
module attributes {stable_mosaic.version = 11 : i64} {
  func.func @_stats_kernel(%arg0: i32, %arg1: i32, %arg2: i32, %arg3: memref<1x4x256xf32, #tpu.memory_space<vmem>>, %arg4: memref<1x1x4x16xf32, #tpu.memory_space<vmem>>, %arg5: memref<1x1x4x16xf32, #tpu.memory_space<vmem>>, %arg6: memref<3x3x32x4xf32, #tpu.memory_space<vmem>>, %arg7: memref<1x1x1x32x1xf32, #tpu.memory_space<vmem>>, %arg8: memref<1x1x1x32x1xf32, #tpu.memory_space<vmem>>) attributes {dimension_semantics = [#tpu.dimension_semantics<parallel>, #tpu.dimension_semantics<parallel>, #tpu.dimension_semantics<arbitrary>], iteration_bounds = array<i64: 2, 1, 1>, scalar_prefetch = 0 : i64, scratch_operands = 0 : i64, tpu.core_type = #tpu.core_type<tc>, window_params = [{transform_indices = @transform_0, window_bounds = array<i64: 1, 4, 256>}, {transform_indices = @transform_1, window_bounds = array<i64: 1, 1, 4, 16>}, {transform_indices = @transform_2, window_bounds = array<i64: 1, 1, 4, 16>}, {transform_indices = @transform_3, window_bounds = array<i64: 3, 3, 32, 4>}, {transform_indices = @transform_4, window_bounds = array<i64: 1, 1, 1, 32, 1>}, {transform_indices = @transform_5, window_bounds = array<i64: 1, 1, 1, 32, 1>}]} {
    %c0 = arith.constant 0 : index
    %c0_0 = arith.constant 0 : index
    %c0_1 = arith.constant 0 : index
    %0 = vector.load %arg3[%c0, %c0_0, %c0_1] : memref<1x4x256xf32, #tpu.memory_space<vmem>>, vector<1x4x256xf32>
    %1 = vector.shape_cast %0 : vector<1x4x256xf32> to vector<4x256xf32>
    %c0_2 = arith.constant 0 : index
    %c0_3 = arith.constant 0 : index
    %c0_4 = arith.constant 0 : index
    %c0_5 = arith.constant 0 : index
    %2 = vector.load %arg4[%c0_2, %c0_3, %c0_4, %c0_5] : memref<1x1x4x16xf32, #tpu.memory_space<vmem>>, vector<1x1x4x16xf32>
    %3 = vector.shape_cast %2 : vector<1x1x4x16xf32> to vector<4x16xf32>
    %c0_6 = arith.constant 0 : index
    %c0_7 = arith.constant 0 : index
    %c0_8 = arith.constant 0 : index
    %c0_9 = arith.constant 0 : index
    %4 = vector.load %arg5[%c0_6, %c0_7, %c0_8, %c0_9] : memref<1x1x4x16xf32, #tpu.memory_space<vmem>>, vector<1x1x4x16xf32>
    %5 = vector.shape_cast %4 : vector<1x1x4x16xf32> to vector<4x16xf32>
    %6 = tpu.iota {dimensions = array<i32: 1>} : vector<1x256xi32>
    %c16_i32 = arith.constant 16 : i32
    %c0_i32 = arith.constant 0 : i32
    %7 = arith.cmpi eq, %c16_i32, %c0_i32 : i32
    %c1_i32 = arith.constant 1 : i32
    %8 = arith.select %7, %c1_i32, %c16_i32 : i32
    %9 = vector.broadcast %8 : i32 to vector<1x256xi32>
    %10 = arith.remsi %6, %9 : vector<1x256xi32>
    %c0_i32_10 = arith.constant 0 : i32
    %11 = vector.broadcast %c0_i32_10 : i32 to vector<1x256xi32>
    %12 = arith.cmpi ne, %10, %11 : vector<1x256xi32>
    %c0_i32_11 = arith.constant 0 : i32
    %13 = vector.broadcast %c0_i32_11 : i32 to vector<1x256xi32>
    %14 = arith.cmpi slt, %10, %13 : vector<1x256xi32>
    %c0_i32_12 = arith.constant 0 : i32
    %15 = arith.cmpi slt, %8, %c0_i32_12 : i32
    %16 = vector.broadcast %15 : i1 to vector<1x256xi1>
    %17 = vector.broadcast %16 : vector<1x256xi1> to vector<1x256xi1>
    %18 = arith.xori %14, %17 : vector<1x256xi1>
    %19 = arith.andi %18, %12 : vector<1x256xi1>
    %20 = vector.broadcast %8 : i32 to vector<1x256xi32>
    %21 = arith.addi %10, %20 : vector<1x256xi32>
    %22 = arith.select %19, %21, %10 : vector<1x256xi1>, vector<1x256xi32>
    %c0_i32_13 = arith.constant 0 : i32
    %23 = vector.broadcast %c0_i32_13 : i32 to vector<1x256xi32>
    %24 = arith.cmpi eq, %22, %23 : vector<1x256xi32>
    %c15_i32 = arith.constant 15 : i32
    %25 = vector.broadcast %c15_i32 : i32 to vector<1x256xi32>
    %26 = arith.cmpi eq, %22, %25 : vector<1x256xi32>
    %cst = arith.constant 0.000000e+00 : f32
    %27 = vector.broadcast %cst : f32 to vector<32x256xf32>
    %28 = vector.extract_strided_slice %1 {offsets = [0, 0], sizes = [4, 240], strides = [1, 1]} : vector<4x256xf32> to vector<4x240xf32>
    %29 = tpu.concatenate %3, %28 in 1 : vector<4x16xf32>, vector<4x240xf32> -> vector<4x256xf32>
    %30 = vector.extract_strided_slice %29 {offsets = [0, 0], sizes = [4, 1], strides = [1, 1]} : vector<4x256xf32> to vector<4x1xf32>
    %31 = vector.extract_strided_slice %29 {offsets = [0, 0], sizes = [4, 255], strides = [1, 1]} : vector<4x256xf32> to vector<4x255xf32>
    %32 = tpu.concatenate %30, %31 in 1 : vector<4x1xf32>, vector<4x255xf32> -> vector<4x256xf32>
    %cst_14 = arith.constant 0.000000e+00 : f32
    %33 = vector.shape_cast %24 : vector<1x256xi1> to vector<1x256xi1>
    %34 = vector.broadcast %33 : vector<1x256xi1> to vector<4x256xi1>
    %35 = vector.broadcast %cst_14 : f32 to vector<4x256xf32>
    %36 = arith.select %34, %35, %32 : vector<4x256xi1>, vector<4x256xf32>
    %c0_15 = arith.constant 0 : index
    %c0_16 = arith.constant 0 : index
    %c0_17 = arith.constant 0 : index
    %c0_18 = arith.constant 0 : index
    %37 = vector.load %arg6[%c0_15, %c0_16, %c0_17, %c0_18] : memref<3x3x32x4xf32, #tpu.memory_space<vmem>>, vector<1x1x32x4xf32>
    %38 = vector.shape_cast %37 : vector<1x1x32x4xf32> to vector<32x4xf32>
    %cst_19 = arith.constant dense<0.000000e+00> : vector<32x256xf32>
    %39 = tpu.matmul %38, %36, %cst_19 {dimension_numbers = #tpu.dot_dimension_numbers<[1], [0], [0], [1], [0, 0, 1, 1], [], []>} : vector<32x4xf32>, vector<4x256xf32>, vector<32x256xf32> -> vector<32x256xf32>
    %40 = arith.addf %27, %39 : vector<32x256xf32>
    %c0_20 = arith.constant 0 : index
    %c1 = arith.constant 1 : index
    %c0_21 = arith.constant 0 : index
    %c0_22 = arith.constant 0 : index
    %41 = vector.load %arg6[%c0_20, %c1, %c0_21, %c0_22] : memref<3x3x32x4xf32, #tpu.memory_space<vmem>>, vector<1x1x32x4xf32>
    %42 = vector.shape_cast %41 : vector<1x1x32x4xf32> to vector<32x4xf32>
    %cst_23 = arith.constant dense<0.000000e+00> : vector<32x256xf32>
    %43 = tpu.matmul %42, %29, %cst_23 {dimension_numbers = #tpu.dot_dimension_numbers<[1], [0], [0], [1], [0, 0, 1, 1], [], []>} : vector<32x4xf32>, vector<4x256xf32>, vector<32x256xf32> -> vector<32x256xf32>
    %44 = arith.addf %40, %43 : vector<32x256xf32>
    %45 = vector.extract_strided_slice %29 {offsets = [0, 1], sizes = [4, 255], strides = [1, 1]} : vector<4x256xf32> to vector<4x255xf32>
    %46 = vector.extract_strided_slice %29 {offsets = [0, 255], sizes = [4, 1], strides = [1, 1]} : vector<4x256xf32> to vector<4x1xf32>
    %47 = tpu.concatenate %45, %46 in 1 : vector<4x255xf32>, vector<4x1xf32> -> vector<4x256xf32>
    %cst_24 = arith.constant 0.000000e+00 : f32
    %48 = vector.shape_cast %26 : vector<1x256xi1> to vector<1x256xi1>
    %49 = vector.broadcast %48 : vector<1x256xi1> to vector<4x256xi1>
    %50 = vector.broadcast %cst_24 : f32 to vector<4x256xf32>
    %51 = arith.select %49, %50, %47 : vector<4x256xi1>, vector<4x256xf32>
    %c0_25 = arith.constant 0 : index
    %c2 = arith.constant 2 : index
    %c0_26 = arith.constant 0 : index
    %c0_27 = arith.constant 0 : index
    %52 = vector.load %arg6[%c0_25, %c2, %c0_26, %c0_27] : memref<3x3x32x4xf32, #tpu.memory_space<vmem>>, vector<1x1x32x4xf32>
    %53 = vector.shape_cast %52 : vector<1x1x32x4xf32> to vector<32x4xf32>
    %cst_28 = arith.constant dense<0.000000e+00> : vector<32x256xf32>
    %54 = tpu.matmul %53, %51, %cst_28 {dimension_numbers = #tpu.dot_dimension_numbers<[1], [0], [0], [1], [0, 0, 1, 1], [], []>} : vector<32x4xf32>, vector<4x256xf32>, vector<32x256xf32> -> vector<32x256xf32>
    %55 = arith.addf %44, %54 : vector<32x256xf32>
    %56 = vector.extract_strided_slice %1 {offsets = [0, 0], sizes = [4, 1], strides = [1, 1]} : vector<4x256xf32> to vector<4x1xf32>
    %57 = vector.extract_strided_slice %1 {offsets = [0, 0], sizes = [4, 255], strides = [1, 1]} : vector<4x256xf32> to vector<4x255xf32>
    %58 = tpu.concatenate %56, %57 in 1 : vector<4x1xf32>, vector<4x255xf32> -> vector<4x256xf32>
    %cst_29 = arith.constant 0.000000e+00 : f32
    %59 = vector.shape_cast %24 : vector<1x256xi1> to vector<1x256xi1>
    %60 = vector.broadcast %59 : vector<1x256xi1> to vector<4x256xi1>
    %61 = vector.broadcast %cst_29 : f32 to vector<4x256xf32>
    %62 = arith.select %60, %61, %58 : vector<4x256xi1>, vector<4x256xf32>
    %c1_30 = arith.constant 1 : index
    %c0_31 = arith.constant 0 : index
    %c0_32 = arith.constant 0 : index
    %c0_33 = arith.constant 0 : index
    %63 = vector.load %arg6[%c1_30, %c0_31, %c0_32, %c0_33] : memref<3x3x32x4xf32, #tpu.memory_space<vmem>>, vector<1x1x32x4xf32>
    %64 = vector.shape_cast %63 : vector<1x1x32x4xf32> to vector<32x4xf32>
    %cst_34 = arith.constant dense<0.000000e+00> : vector<32x256xf32>
    %65 = tpu.matmul %64, %62, %cst_34 {dimension_numbers = #tpu.dot_dimension_numbers<[1], [0], [0], [1], [0, 0, 1, 1], [], []>} : vector<32x4xf32>, vector<4x256xf32>, vector<32x256xf32> -> vector<32x256xf32>
    %66 = arith.addf %55, %65 : vector<32x256xf32>
    %c1_35 = arith.constant 1 : index
    %c1_36 = arith.constant 1 : index
    %c0_37 = arith.constant 0 : index
    %c0_38 = arith.constant 0 : index
    %67 = vector.load %arg6[%c1_35, %c1_36, %c0_37, %c0_38] : memref<3x3x32x4xf32, #tpu.memory_space<vmem>>, vector<1x1x32x4xf32>
    %68 = vector.shape_cast %67 : vector<1x1x32x4xf32> to vector<32x4xf32>
    %cst_39 = arith.constant dense<0.000000e+00> : vector<32x256xf32>
    %69 = tpu.matmul %68, %1, %cst_39 {dimension_numbers = #tpu.dot_dimension_numbers<[1], [0], [0], [1], [0, 0, 1, 1], [], []>} : vector<32x4xf32>, vector<4x256xf32>, vector<32x256xf32> -> vector<32x256xf32>
    %70 = arith.addf %66, %69 : vector<32x256xf32>
    %71 = vector.extract_strided_slice %1 {offsets = [0, 1], sizes = [4, 255], strides = [1, 1]} : vector<4x256xf32> to vector<4x255xf32>
    %72 = vector.extract_strided_slice %1 {offsets = [0, 255], sizes = [4, 1], strides = [1, 1]} : vector<4x256xf32> to vector<4x1xf32>
    %73 = tpu.concatenate %71, %72 in 1 : vector<4x255xf32>, vector<4x1xf32> -> vector<4x256xf32>
    %cst_40 = arith.constant 0.000000e+00 : f32
    %74 = vector.shape_cast %26 : vector<1x256xi1> to vector<1x256xi1>
    %75 = vector.broadcast %74 : vector<1x256xi1> to vector<4x256xi1>
    %76 = vector.broadcast %cst_40 : f32 to vector<4x256xf32>
    %77 = arith.select %75, %76, %73 : vector<4x256xi1>, vector<4x256xf32>
    %c1_41 = arith.constant 1 : index
    %c2_42 = arith.constant 2 : index
    %c0_43 = arith.constant 0 : index
    %c0_44 = arith.constant 0 : index
    %78 = vector.load %arg6[%c1_41, %c2_42, %c0_43, %c0_44] : memref<3x3x32x4xf32, #tpu.memory_space<vmem>>, vector<1x1x32x4xf32>
    %79 = vector.shape_cast %78 : vector<1x1x32x4xf32> to vector<32x4xf32>
    %cst_45 = arith.constant dense<0.000000e+00> : vector<32x256xf32>
    %80 = tpu.matmul %79, %77, %cst_45 {dimension_numbers = #tpu.dot_dimension_numbers<[1], [0], [0], [1], [0, 0, 1, 1], [], []>} : vector<32x4xf32>, vector<4x256xf32>, vector<32x256xf32> -> vector<32x256xf32>
    %81 = arith.addf %70, %80 : vector<32x256xf32>
    %82 = vector.extract_strided_slice %1 {offsets = [0, 16], sizes = [4, 240], strides = [1, 1]} : vector<4x256xf32> to vector<4x240xf32>
    %83 = tpu.concatenate %82, %5 in 1 : vector<4x240xf32>, vector<4x16xf32> -> vector<4x256xf32>
    %84 = vector.extract_strided_slice %83 {offsets = [0, 0], sizes = [4, 1], strides = [1, 1]} : vector<4x256xf32> to vector<4x1xf32>
    %85 = vector.extract_strided_slice %83 {offsets = [0, 0], sizes = [4, 255], strides = [1, 1]} : vector<4x256xf32> to vector<4x255xf32>
    %86 = tpu.concatenate %84, %85 in 1 : vector<4x1xf32>, vector<4x255xf32> -> vector<4x256xf32>
    %cst_46 = arith.constant 0.000000e+00 : f32
    %87 = vector.shape_cast %24 : vector<1x256xi1> to vector<1x256xi1>
    %88 = vector.broadcast %87 : vector<1x256xi1> to vector<4x256xi1>
    %89 = vector.broadcast %cst_46 : f32 to vector<4x256xf32>
    %90 = arith.select %88, %89, %86 : vector<4x256xi1>, vector<4x256xf32>
    %c2_47 = arith.constant 2 : index
    %c0_48 = arith.constant 0 : index
    %c0_49 = arith.constant 0 : index
    %c0_50 = arith.constant 0 : index
    %91 = vector.load %arg6[%c2_47, %c0_48, %c0_49, %c0_50] : memref<3x3x32x4xf32, #tpu.memory_space<vmem>>, vector<1x1x32x4xf32>
    %92 = vector.shape_cast %91 : vector<1x1x32x4xf32> to vector<32x4xf32>
    %cst_51 = arith.constant dense<0.000000e+00> : vector<32x256xf32>
    %93 = tpu.matmul %92, %90, %cst_51 {dimension_numbers = #tpu.dot_dimension_numbers<[1], [0], [0], [1], [0, 0, 1, 1], [], []>} : vector<32x4xf32>, vector<4x256xf32>, vector<32x256xf32> -> vector<32x256xf32>
    %94 = arith.addf %81, %93 : vector<32x256xf32>
    %c2_52 = arith.constant 2 : index
    %c1_53 = arith.constant 1 : index
    %c0_54 = arith.constant 0 : index
    %c0_55 = arith.constant 0 : index
    %95 = vector.load %arg6[%c2_52, %c1_53, %c0_54, %c0_55] : memref<3x3x32x4xf32, #tpu.memory_space<vmem>>, vector<1x1x32x4xf32>
    %96 = vector.shape_cast %95 : vector<1x1x32x4xf32> to vector<32x4xf32>
    %cst_56 = arith.constant dense<0.000000e+00> : vector<32x256xf32>
    %97 = tpu.matmul %96, %83, %cst_56 {dimension_numbers = #tpu.dot_dimension_numbers<[1], [0], [0], [1], [0, 0, 1, 1], [], []>} : vector<32x4xf32>, vector<4x256xf32>, vector<32x256xf32> -> vector<32x256xf32>
    %98 = arith.addf %94, %97 : vector<32x256xf32>
    %99 = vector.extract_strided_slice %83 {offsets = [0, 1], sizes = [4, 255], strides = [1, 1]} : vector<4x256xf32> to vector<4x255xf32>
    %100 = vector.extract_strided_slice %83 {offsets = [0, 255], sizes = [4, 1], strides = [1, 1]} : vector<4x256xf32> to vector<4x1xf32>
    %101 = tpu.concatenate %99, %100 in 1 : vector<4x255xf32>, vector<4x1xf32> -> vector<4x256xf32>
    %cst_57 = arith.constant 0.000000e+00 : f32
    %102 = vector.shape_cast %26 : vector<1x256xi1> to vector<1x256xi1>
    %103 = vector.broadcast %102 : vector<1x256xi1> to vector<4x256xi1>
    %104 = vector.broadcast %cst_57 : f32 to vector<4x256xf32>
    %105 = arith.select %103, %104, %101 : vector<4x256xi1>, vector<4x256xf32>
    %c2_58 = arith.constant 2 : index
    %c2_59 = arith.constant 2 : index
    %c0_60 = arith.constant 0 : index
    %c0_61 = arith.constant 0 : index
    %106 = vector.load %arg6[%c2_58, %c2_59, %c0_60, %c0_61] : memref<3x3x32x4xf32, #tpu.memory_space<vmem>>, vector<1x1x32x4xf32>
    %107 = vector.shape_cast %106 : vector<1x1x32x4xf32> to vector<32x4xf32>
    %cst_62 = arith.constant dense<0.000000e+00> : vector<32x256xf32>
    %108 = tpu.matmul %107, %105, %cst_62 {dimension_numbers = #tpu.dot_dimension_numbers<[1], [0], [0], [1], [0, 0, 1, 1], [], []>} : vector<32x4xf32>, vector<4x256xf32>, vector<32x256xf32> -> vector<32x256xf32>
    %109 = arith.addf %98, %108 : vector<32x256xf32>
    %cst_63 = arith.constant dense<0.000000e+00> : vector<32xf32>
    %110 = vector.multi_reduction <add>, %109, %cst_63 [1] : vector<32x256xf32> to vector<32xf32>
    %111 = vector.shape_cast %110 : vector<32xf32> to vector<32x1xf32>
    %c0_64 = arith.constant 0 : index
    %c0_65 = arith.constant 0 : index
    %c0_66 = arith.constant 0 : index
    %c0_67 = arith.constant 0 : index
    %c0_68 = arith.constant 0 : index
    %112 = vector.load %arg7[%c0_64, %c0_65, %c0_66, %c0_67, %c0_68] : memref<1x1x1x32x1xf32, #tpu.memory_space<vmem>>, vector<1x1x1x32x1xf32>
    %113 = vector.shape_cast %112 : vector<1x1x1x32x1xf32> to vector<32x1xf32>
    %114 = vector.shape_cast %111 : vector<32x1xf32> to vector<1x1x1x32x1xf32>
    tpu.vector_store %arg7[%c0_64, %c0_65, %c0_66, %c0_67, %c0_68], %114 {strides = array<i32>} : memref<1x1x1x32x1xf32, #tpu.memory_space<vmem>>, vector<1x1x1x32x1xf32>,
    %115 = arith.mulf %109, %109 : vector<32x256xf32>
    %cst_69 = arith.constant dense<0.000000e+00> : vector<32xf32>
    %116 = vector.multi_reduction <add>, %115, %cst_69 [1] : vector<32x256xf32> to vector<32xf32>
    %117 = vector.shape_cast %116 : vector<32xf32> to vector<32x1xf32>
    %c0_70 = arith.constant 0 : index
    %c0_71 = arith.constant 0 : index
    %c0_72 = arith.constant 0 : index
    %c0_73 = arith.constant 0 : index
    %c0_74 = arith.constant 0 : index
    %118 = vector.load %arg8[%c0_70, %c0_71, %c0_72, %c0_73, %c0_74] : memref<1x1x1x32x1xf32, #tpu.memory_space<vmem>>, vector<1x1x1x32x1xf32>
    %119 = vector.shape_cast %118 : vector<1x1x1x32x1xf32> to vector<32x1xf32>
    %120 = vector.shape_cast %117 : vector<32x1xf32> to vector<1x1x1x32x1xf32>
    tpu.vector_store %arg8[%c0_70, %c0_71, %c0_72, %c0_73, %c0_74], %120 {strides = array<i32>} : memref<1x1x1x32x1xf32, #tpu.memory_space<vmem>>, vector<1x1x1x32x1xf32>,
    return
  }
  func.func @transform_0(%arg0: i32, %arg1: i32, %arg2: i32) -> (i32, i32, i32) {
    %c0_i32 = arith.constant 0 : i32
    %c0_i32_0 = arith.constant 0 : i32
    return %arg0, %c0_i32, %arg1 : i32, i32, i32
  }
  func.func @transform_1(%arg0: i32, %arg1: i32, %arg2: i32) -> (i32, i32, i32, i32) {
    %c0_i32 = arith.constant 0 : i32
    %c0_i32_0 = arith.constant 0 : i32
    %c0_i32_1 = arith.constant 0 : i32
    return %arg0, %arg1, %c0_i32, %c0_i32_0 : i32, i32, i32, i32
  }
  func.func @transform_2(%arg0: i32, %arg1: i32, %arg2: i32) -> (i32, i32, i32, i32) {
    %c0_i32 = arith.constant 0 : i32
    %c0_i32_0 = arith.constant 0 : i32
    %c0_i32_1 = arith.constant 0 : i32
    return %arg0, %arg1, %c0_i32, %c0_i32_0 : i32, i32, i32, i32
  }
  func.func @transform_3(%arg0: i32, %arg1: i32, %arg2: i32) -> (i32, i32, i32, i32) {
    %c0_i32 = arith.constant 0 : i32
    %c0_i32_0 = arith.constant 0 : i32
    %c0_i32_1 = arith.constant 0 : i32
    %c0_i32_2 = arith.constant 0 : i32
    return %c0_i32, %c0_i32_0, %arg2, %c0_i32_1 : i32, i32, i32, i32
  }
  func.func @transform_4(%arg0: i32, %arg1: i32, %arg2: i32) -> (i32, i32, i32, i32, i32) {
    %c0_i32 = arith.constant 0 : i32
    %c0_i32_0 = arith.constant 0 : i32
    %c0_i32_1 = arith.constant 0 : i32
    return %arg0, %arg1, %arg2, %c0_i32, %c0_i32_0 : i32, i32, i32, i32, i32
  }
  func.func @transform_5(%arg0: i32, %arg1: i32, %arg2: i32) -> (i32, i32, i32, i32, i32) {
    %c0_i32 = arith.constant 0 : i32
    %c0_i32_0 = arith.constant 0 : i32
    %c0_i32_1 = arith.constant 0 : i32
    return %arg0, %arg1, %arg2, %c0_i32, %c0_i32_0 : i32, i32, i32, i32, i32
  }
}

</mosaic_0001>

<llo_original>
// kernel: tpu_custom_call.1
$region0: #{tpu_custom_call.1}
  #allocation0 [shape = 'u32[]', space=smem, size = 0x4, offset = 0x4, fixed_abs, tag = 'smem constant byte address 0x4 - core index']
  #allocation1 [shape = 'u32[144,128]{1,0:T(1,128)}', space=vmem, size = 0x12000, scoped, tag = 'internal scratch']
  %s0 = inlined_call_operand.vmem [shape: f32[2,4,256], index: 0, kind: input, shape index: {}]
  %s1 = inlined_call_operand.vmem [shape: f32[2,1,4,16], index: 1, kind: input, shape index: {}]
  %s2 = inlined_call_operand.vmem [shape: f32[2,1,4,16], index: 2, kind: input, shape index: {}]
  %s3 = inlined_call_operand.vmem [shape: f32[3,3,32,4], index: 3, kind: input, shape index: {}]
  %s4 = inlined_call_operand.vmem [shape: f32[2,1,1,32,1], index: 4, kind: output, shape index: {0}]
  %s5 = inlined_call_operand.vmem [shape: f32[2,1,1,32,1], index: 5, kind: output, shape index: {1}]
  %6 = xla_tuple %s4, %s5
  %s7 = sld [smem:[#allocation0]]
  $region57: #{tpu_custom_call.1} parent=0
    _
  %s9 = ssub.s32 1, %s7
  %s10 = scalar_select 0, %s9, %s7
  loop: start=0, step=1, limit=4
  $region2: #{tpu_custom_call.1} parent=0 // loop_pre_header
    _
  $region3: #{tpu_custom_call.1} parent=0 // loop_header
    %s12 = sphi 0, %s16
    %p13 = scmp.ge.s32.totalorder %s12, 4
    %s19 = sphi 0, %s38
    %s20 = sphi 0, %s34
    %s21 = sphi 0, %s30
    %s22 = sphi 0, %s19
    %s23 = sphi 0, %s20
    %s24 = sphi 0, %s21
    %s25 = sphi 0, %s22
    %s26 = sphi 0, %s23
    %s27 = sphi 0, %s24
    %s43 = sphi 0, %s45
    %s46 = sphi 0, %s43
    %s47 = sphi 0, %s46
    %s63 = sphi 0, %s47
    %s71 = sphi 0, %s73
    %s74 = sphi 0, %s71
    %s75 = sphi 0, %s74
    %s91 = sphi 0, %s75
    %s99 = sphi 0, %s101
    %s102 = sphi 0, %s99
    %s103 = sphi 0, %s102
    %s119 = sphi 0, %s103
    %s125 = sphi 0, %s127
    %s128 = sphi 0, %s125
    %s129 = sphi 0, %s128
    %s145 = sphi 0, %s129
    %s155 = sphi 0, %s157
    %s158 = sphi 0, %s155
    %s159 = sphi 0, %s158
    %s175 = sphi 0, %s159
    %s185 = sphi 0, %s187
    %s188 = sphi 0, %s185
    %s189 = sphi 0, %s188
    %s205 = sphi 0, %s189
  $region4: #{tpu_custom_call.1} parent=0 // loop_header_branch
    %15 = sbr.rel (%p13) target = $region8
  $region5: #{tpu_custom_call.1} parent=0 // loop_body
    %s17 = ssub.s32 %s12, 1
    %s18 = ssub.s32 %s12, 2
    %s28 = sadd.s32 1, %s21
    %p29 = scmp.ge.s32.totalorder %s28, 1
    %s30 = scalar_select %p29, 0, %s28
    %s31 = sadd.s32 1, %s20
    %s32 = scalar_select %p29, %s31, %s20
    %p33 = scmp.ge.s32.totalorder %s32, 1
    %s34 = scalar_select %p33, 0, %s32
    %s35 = sadd.s32 1, %s19
    %s36 = scalar_select %p33, %s35, %s19
    %p37 = scmp.ge.s32.totalorder %s36, 2
    %s38 = scalar_select %p37, 0, %s36
    %s39 = ssub.s32 %s19, %s38
    %s40 = ssub.s32 %s20, %s34
    %s41 = sor.u32 %s39, %s40
    %p42 = scmp.eq.s32.totalorder %s41, 0
    %s44 = sadd.s32 %s43, 1
    %s45 = scalar_select %p42, %s43, %s44
    %p48 = pneg %p42
    %p49 = scmp.eq.s32.totalorder %s12, 1
    %p50 = por %p48, %p49
    %p51 = scmp.ne.s32.totalorder %s43, %s46
    %p52 = scmp.eq.s32.totalorder %s12, 0
    %p53 = por %p51, %p52
    %p54 = scmp.ne.s32.totalorder %s43, %s46
    %p55 = scmp.eq.s32.totalorder %s17, 1
    %p56 = por %p54, %p55
    %p57 = scmp.ne.s32.totalorder %s46, %s47
    %p58 = scmp.eq.s32.totalorder %s17, 0
    %p59 = por %p57, %p58
    %p60 = scmp.ne.s32.totalorder %s46, %s47
    %p61 = scmp.eq.s32.totalorder %s18, 1
    %p62 = por %p60, %p61
    %p64 = scmp.ne.s32.totalorder %s47, %s63
    %p65 = scmp.eq.s32.totalorder %s18, 0
    %p66 = por %p64, %p65
    %s67 = ssub.s32 %s19, %s38
    %s68 = ssub.s32 %s20, %s34
    %s69 = sor.u32 %s67, %s68
    %p70 = scmp.eq.s32.totalorder %s69, 0
    %s72 = sadd.s32 %s71, 1
    %s73 = scalar_select %p70, %s71, %s72
    %p76 = pneg %p70
    %p77 = scmp.eq.s32.totalorder %s12, 1
    %p78 = por %p76, %p77
    %p79 = scmp.ne.s32.totalorder %s71, %s74
    %p80 = scmp.eq.s32.totalorder %s12, 0
    %p81 = por %p79, %p80
    %p82 = scmp.ne.s32.totalorder %s71, %s74
    %p83 = scmp.eq.s32.totalorder %s17, 1
    %p84 = por %p82, %p83
    %p85 = scmp.ne.s32.totalorder %s74, %s75
    %p86 = scmp.eq.s32.totalorder %s17, 0
    %p87 = por %p85, %p86
    %p88 = scmp.ne.s32.totalorder %s74, %s75
    %p89 = scmp.eq.s32.totalorder %s18, 1
    %p90 = por %p88, %p89
    %p92 = scmp.ne.s32.totalorder %s75, %s91
    %p93 = scmp.eq.s32.totalorder %s18, 0
    %p94 = por %p92, %p93
    %s95 = ssub.s32 %s19, %s38
    %s96 = ssub.s32 %s20, %s34
    %s97 = sor.u32 %s95, %s96
    %p98 = scmp.eq.s32.totalorder %s97, 0
    %s100 = sadd.s32 %s99, 1
    %s101 = scalar_select %p98, %s99, %s100
    %p104 = pneg %p98
    %p105 = scmp.eq.s32.totalorder %s12, 1
    %p106 = por %p104, %p105
    %p107 = scmp.ne.s32.totalorder %s99, %s102
    %p108 = scmp.eq.s32.totalorder %s12, 0
    %p109 = por %p107, %p108
    %p110 = scmp.ne.s32.totalorder %s99, %s102
    %p111 = scmp.eq.s32.totalorder %s17, 1
    %p112 = por %p110, %p111
    %p113 = scmp.ne.s32.totalorder %s102, %s103
    %p114 = scmp.eq.s32.totalorder %s17, 0
    %p115 = por %p113, %p114
    %p116 = scmp.ne.s32.totalorder %s102, %s103
    %p117 = scmp.eq.s32.totalorder %s18, 1
    %p118 = por %p116, %p117
    %p120 = scmp.ne.s32.totalorder %s103, %s119
    %p121 = scmp.eq.s32.totalorder %s18, 0
    %p122 = por %p120, %p121
    %s123 = ssub.s32 %s21, %s30
    %p124 = scmp.eq.s32.totalorder %s123, 0
    %s126 = sadd.s32 %s125, 1
    %s127 = scalar_select %p124, %s125, %s126
    %p130 = pneg %p124
    %p131 = scmp.eq.s32.totalorder %s12, 1
    %p132 = por %p130, %p131
    %p133 = scmp.ne.s32.totalorder %s125, %s128
    %p134 = scmp.eq.s32.totalorder %s12, 0
    %p135 = por %p133, %p134
    %p136 = scmp.ne.s32.totalorder %s125, %s128
    %p137 = scmp.eq.s32.totalorder %s17, 1
    %p138 = por %p136, %p137
    %p139 = scmp.ne.s32.totalorder %s128, %s129
    %p140 = scmp.eq.s32.totalorder %s17, 0
    %p141 = por %p139, %p140
    %p142 = scmp.ne.s32.totalorder %s128, %s129
    %p143 = scmp.eq.s32.totalorder %s18, 1
    %p144 = por %p142, %p143
    %p146 = scmp.ne.s32.totalorder %s129, %s145
    %p147 = scmp.eq.s32.totalorder %s18, 0
    %p148 = por %p146, %p147
    %s149 = ssub.s32 %s19, %s38
    %s150 = ssub.s32 %s20, %s34
    %s151 = sor.u32 %s149, %s150
    %s152 = ssub.s32 %s21, %s30
    %s153 = sor.u32 %s151, %s152
    %p154 = scmp.eq.s32.totalorder %s153, 0
    %s156 = sadd.s32 %s155, 1
    %s157 = scalar_select %p154, %s155, %s156
    %p160 = pneg %p154
    %p161 = scmp.eq.s32.totalorder %s12, 1
    %p162 = por %p160, %p161
    %p163 = scmp.ne.s32.totalorder %s155, %s158
    %p164 = scmp.eq.s32.totalorder %s12, 0
    %p165 = por %p163, %p164
    %p166 = scmp.ne.s32.totalorder %s155, %s158
    %p167 = scmp.eq.s32.totalorder %s17, 1
    %p168 = por %p166, %p167
    %p169 = scmp.ne.s32.totalorder %s158, %s159
    %p170 = scmp.eq.s32.totalorder %s17, 0
    %p171 = por %p169, %p170
    %p172 = scmp.ne.s32.totalorder %s158, %s159
    %p173 = scmp.eq.s32.totalorder %s18, 1
    %p174 = por %p172, %p173
    %p176 = scmp.ne.s32.totalorder %s159, %s175
    %p177 = scmp.eq.s32.totalorder %s18, 0
    %p178 = por %p176, %p177
    %s179 = ssub.s32 %s19, %s38
    %s180 = ssub.s32 %s20, %s34
    %s181 = sor.u32 %s179, %s180
    %s182 = ssub.s32 %s21, %s30
    %s183 = sor.u32 %s181, %s182
    %p184 = scmp.eq.s32.totalorder %s183, 0
    %s186 = sadd.s32 %s185, 1
    %s187 = scalar_select %p184, %s185, %s186
    %p190 = pneg %p184
    %p191 = scmp.eq.s32.totalorder %s12, 1
    %p192 = por %p190, %p191
    %p193 = scmp.ne.s32.totalorder %s185, %s188
    %p194 = scmp.eq.s32.totalorder %s12, 0
    %p195 = por %p193, %p194
    %p196 = scmp.ne.s32.totalorder %s185, %s188
    %p197 = scmp.eq.s32.totalorder %s17, 1
    %p198 = por %p196, %p197
    %p199 = scmp.ne.s32.totalorder %s188, %s189
    %p200 = scmp.eq.s32.totalorder %s17, 0
    %p201 = por %p199, %p200
    %p202 = scmp.ne.s32.totalorder %s188, %s189
    %p203 = scmp.eq.s32.totalorder %s18, 1
    %p204 = por %p202, %p203
    %p206 = scmp.ne.s32.totalorder %s189, %s205
    %p207 = scmp.eq.s32.totalorder %s18, 0
    %p208 = por %p206, %p207
    %p209 = scmp.le.s32.totalorder 1, %s12
    %p210 = scmp.lt.s32.totalorder %s12, 3
    %p211 = pnand %p209, %p210
    %p212 = pneg %p211
    // Predicated region
    $region9: #{tpu_custom_call.1} parent=5 // pred_check
      _
    $region10: #{tpu_custom_call.1} parent=5 // pred_check_branch
      %214 = sbr.rel (%p211) target = $region12
    $region11: #{tpu_custom_call.1} parent=5 // pred_region
      %s215 = ssub.s32 %s12, 1
      // Predicated region
      $region13: #{tpu_custom_call.1} parent=11 // pred_check
        %p216 = pneg %p141
      $region14: #{tpu_custom_call.1} parent=11 // pred_check_branch
        %218 = sbr.rel (%p216) target = $region16
      $region15: #{tpu_custom_call.1} parent=11 // pred_region
        %s219 = smul.u32 4, %s24
        %p220 = scmp.lt.s32.totalorder %s219, 3
        %s221 = scalar_select %p220, %s219, 3
        %s222 = smul.addr %s221, 8
        %s223 = scalar_lea.vmem %s3, %s222
        %s224 = smul.u32 4, %s24
      $region16: #{tpu_custom_call.1} parent=11 // pred_fallthru
        _
    $region12: #{tpu_custom_call.1} parent=5 // pred_fallthru
      _
    %p225 = scmp.lt.s32.totalorder %s12, 2
    // Predicated region
    $region17: #{tpu_custom_call.1} parent=5 // pred_check
      %p226 = pneg %p225
    $region18: #{tpu_custom_call.1} parent=5 // pred_check_branch
      %228 = sbr.rel (%p226) target = $region20
    $region19: #{tpu_custom_call.1} parent=5 // pred_region
      // Predicated region
      $region21: #{tpu_custom_call.1} parent=19 // pred_check
        %p229 = pneg %p53
      $region22: #{tpu_custom_call.1} parent=19 // pred_check_branch
        %231 = sbr.rel (%p229) target = $region24
      $region23: #{tpu_custom_call.1} parent=19 // pred_region
        %s232 = smul.u32 2, %s20
        %p233 = scmp.lt.s32.totalorder %s19, 1
        %s234 = scalar_select %p233, %s19, 1
        %p235 = scmp.lt.s32.totalorder %s232, 1
        %s236 = scalar_select %p235, %s232, 1
        %s237 = smul.addr %s234, 2
        %s238 = sadd.s32 %s236, %s237
        %s239 = smul.addr %s238, 4
        %s240 = scalar_lea.vmem %s0, %s239
        %s241 = smul.u32 2, %s20
      $region24: #{tpu_custom_call.1} parent=19 // pred_fallthru
        _
      // Predicated region
      $region25: #{tpu_custom_call.1} parent=19 // pred_check
        %p242 = pneg %p81
      $region26: #{tpu_custom_call.1} parent=19 // pred_check_branch
        %244 = sbr.rel (%p242) target = $region28
      $region27: #{tpu_custom_call.1} parent=19 // pred_region
        %p245 = scmp.lt.s32.totalorder %s19, 1
        %s246 = scalar_select %p245, %s19, 1
        %p247 = scmp.lt.s32.totalorder %s20, 0
        %s248 = scalar_select %p247, %s20, 0
        %s249 = sadd.s32 %s248, %s246
        %s250 = smul.addr %s249, 4
        %s251 = scalar_lea.vmem %s1, %s250
      $region28: #{tpu_custom_call.1} parent=19 // pred_fallthru
        _
      // Predicated region
      $region29: #{tpu_custom_call.1} parent=19 // pred_check
        %p252 = pneg %p109
      $region30: #{tpu_custom_call.1} parent=19 // pred_check_branch
        %254 = sbr.rel (%p252) target = $region32
      $region31: #{tpu_custom_call.1} parent=19 // pred_region
        %p255 = scmp.lt.s32.totalorder %s19, 1
        %s256 = scalar_select %p255, %s19, 1
        %p257 = scmp.lt.s32.totalorder %s20, 0
        %s258 = scalar_select %p257, %s20, 0
        %s259 = sadd.s32 %s258, %s256
        %s260 = smul.addr %s259, 4
        %s261 = scalar_lea.vmem %s2, %s260
      $region32: #{tpu_custom_call.1} parent=19 // pred_fallthru
        _
    $region20: #{tpu_custom_call.1} parent=5 // pred_fallthru
      _
    %p262 = scmp.le.s32.totalorder 1, %s12
    %p263 = scmp.lt.s32.totalorder %s12, 3
    %p264 = pnand %p262, %p263
    %p265 = pneg %p264
    // Predicated region
    $region33: #{tpu_custom_call.1} parent=5 // pred_check
      _
    $region34: #{tpu_custom_call.1} parent=5 // pred_check_branch
      %267 = sbr.rel (%p264) target = $region36
    $region35: #{tpu_custom_call.1} parent=5 // pred_region
      %s268 = ssub.s32 %s12, 1
      %s269 = smul.u32 2, %s23
      %p270 = scmp.lt.s32.totalorder %s22, 1
      %s271 = scalar_select %p270, %s22, 1
      %p272 = scmp.lt.s32.totalorder %s269, 1
      %s273 = scalar_select %p272, %s269, 1
      %s274 = smul.addr %s271, 2
      %s275 = sadd.s32 %s273, %s274
      %s276 = smul.addr %s275, 4
      %s277 = scalar_lea.vmem %s0, %s276
      %p278 = pneg %p59
      %p279 = pneg %p56
      %p280 = scmp.lt.s32.totalorder %s22, 1
      %s281 = scalar_select %p280, %s22, 1
      %p282 = scmp.lt.s32.totalorder %s23, 0
      %s283 = scalar_select %p282, %s23, 0
      %s284 = sadd.s32 %s283, %s281
      %s285 = smul.addr %s284, 4
      %s286 = scalar_lea.vmem %s1, %s285
      %p287 = pneg %p87
      %p288 = pneg %p84
      %p289 = scmp.lt.s32.totalorder %s22, 1
      %s290 = scalar_select %p289, %s22, 1
      %p291 = scmp.lt.s32.totalorder %s23, 0
      %s292 = scalar_select %p291, %s23, 0
      %s293 = sadd.s32 %s292, %s290
      %s294 = smul.addr %s293, 4
      %s295 = scalar_lea.vmem %s2, %s294
      %p296 = pneg %p115
      %p297 = pneg %p112
      %s298 = smul.u32 4, %s24
      %p299 = scmp.lt.s32.totalorder %s298, 3
      %s300 = scalar_select %p299, %s298, 3
      %s301 = smul.addr %s300, 8
      %s302 = scalar_lea.vmem %s3, %s301
      %p303 = pneg %p141
      %p304 = pneg %p138
      %p305 = pneg %p171
      %p306 = pneg %p168
      %p307 = scmp.lt.s32.totalorder %s22, 1
      %s308 = scalar_select %p307, %s22, 1
      %p309 = scmp.lt.s32.totalorder %s23, 0
      %s310 = scalar_select %p309, %s23, 0
      %p311 = scmp.lt.s32.totalorder %s24, 0
      %s312 = scalar_select %p311, %s24, 0
      %s313 = smul.addr %s312, 4
      %s314 = smul.addr %s310, 4
      %s315 = sadd.s32 %s313, %s314
      %s316 = smul.addr %s308, 4
      %s317 = sadd.s32 %s315, %s316
      %s318 = smul.addr %s317, 8
      %s319 = scalar_lea.vmem %s4, %s318
      %p320 = pneg %p201
      %p321 = pneg %p198
      %p322 = scmp.lt.s32.totalorder %s22, 1
      %s323 = scalar_select %p322, %s22, 1
      %p324 = scmp.lt.s32.totalorder %s23, 0
      %s325 = scalar_select %p324, %s23, 0
      %p326 = scmp.lt.s32.totalorder %s24, 0
      %s327 = scalar_select %p326, %s24, 0
      %s328 = smul.addr %s327, 4
      %s329 = smul.addr %s325, 4
      %s330 = sadd.s32 %s328, %s329
      %s331 = smul.addr %s323, 4
      %s332 = sadd.s32 %s330, %s331
      %s333 = smul.addr %s332, 8
      %s334 = scalar_lea.vmem %s5, %s333
      %s335 = smul.u32 2, %s23
      %p336 = scmp.lt.s32.totalorder %s22, 1
      %s337 = scalar_select %p336, %s22, 1
      %p338 = scmp.lt.s32.totalorder %s335, 1
      %s339 = scalar_select %p338, %s335, 1
      %s340 = smul.addr %s337, 2
      %s341 = sadd.s32 %s339, %s340
      %s342 = smul.addr %s341, 4
      %s343 = scalar_lea.vmem %s0, %s342
      %s344 = smul.u32 2, %s23
      %p345 = scmp.lt.s32.totalorder %s22, 1
      %s346 = scalar_select %p345, %s22, 1
      %p347 = scmp.lt.s32.totalorder %s23, 0
      %s348 = scalar_select %p347, %s23, 0
      %s349 = sadd.s32 %s348, %s346
      %s350 = smul.addr %s349, 4
      %s351 = scalar_lea.vmem %s1, %s350
      %p352 = scmp.lt.s32.totalorder %s22, 1
      %s353 = scalar_select %p352, %s22, 1
      %p354 = scmp.lt.s32.totalorder %s23, 0
      %s355 = scalar_select %p354, %s23, 0
      %s356 = sadd.s32 %s355, %s353
      %s357 = smul.addr %s356, 4
      %s358 = scalar_lea.vmem %s2, %s357
      %s359 = smul.u32 4, %s24
      %p360 = scmp.lt.s32.totalorder %s359, 3
      %s361 = scalar_select %p360, %s359, 3
      %s362 = smul.addr %s361, 8
      %s363 = scalar_lea.vmem %s3, %s362
      %s364 = smul.u32 4, %s24
      %p365 = scmp.lt.s32.totalorder %s22, 1
      %s366 = scalar_select %p365, %s22, 1
      %p367 = scmp.lt.s32.totalorder %s23, 0
      %s368 = scalar_select %p367, %s23, 0
      %p369 = scmp.lt.s32.totalorder %s24, 0
      %s370 = scalar_select %p369, %s24, 0
      %s371 = smul.addr %s370, 4
      %s372 = smul.addr %s368, 4
      %s373 = sadd.s32 %s371, %s372
      %s374 = smul.addr %s366, 4
      %s375 = sadd.s32 %s373, %s374
      %s376 = smul.addr %s375, 8
      %s377 = scalar_lea.vmem %s4, %s376
      %p378 = scmp.lt.s32.totalorder %s22, 1
      %s379 = scalar_select %p378, %s22, 1
      %p380 = scmp.lt.s32.totalorder %s23, 0
      %s381 = scalar_select %p380, %s23, 0
      %p382 = scmp.lt.s32.totalorder %s24, 0
      %s383 = scalar_select %p382, %s24, 0
      %s384 = smul.addr %s383, 4
      %s385 = smul.addr %s381, 4
      %s386 = sadd.s32 %s384, %s385
      %s387 = smul.addr %s379, 4
      %s388 = sadd.s32 %s386, %s387
      %s389 = smul.addr %s388, 8
      %s390 = scalar_lea.vmem %s5, %s389
      %v391 = vld [vmem:[%s343] sm:$0xff]
      %v392 = vld [vmem:[%s351] sm:$0xf]
      %v393 = vld [vmem:[%s358] sm:$0xf]
      %v394 = vlaneseq
      %v395 = vand.u32 %v394, 127
      %v396 = vadd.s32 %v395, 128
      %vm397 = vcmp.lt.s32.totalorder %v395, 0
      %v398 = vsub.s32 0, %v395
      %v399 = vsel %vm397, %v398, %v395
      %v400 = vshrl.u32 %v399, 4
      %v401 = vand.u32 %v399, 15
      %v402 = vsub.s32 0, %v401
      %v403 = vsel %vm397, %v402, %v401
      %vm404 = vcmp.lt.s32.totalorder %v396, 0
      %v405 = vsub.s32 0, %v396
      %v406 = vsel %vm404, %v405, %v396
      %v407 = vshrl.u32 %v406, 4
      %v408 = vand.u32 %v406, 15
      %v409 = vsub.s32 0, %v408
      %v410 = vsel %vm404, %v409, %v408
      %vm411 = vcmp.ne.s32.totalorder %v403, 0
      %vm412 = vcmp.ne.s32.totalorder %v410, 0
      %vm413 = vcmp.lt.s32.totalorder %v403, 0
      %vm414 = vcmp.lt.s32.totalorder %v410, 0
      %vm415 = vmand %vm413, %vm411
      %vm416 = vmand %vm414, %vm412
      %v417 = vadd.s32 %v403, 16
      %v418 = vadd.s32 %v410, 16
      %v419 = vsel %vm415, %v417, %v403
      %v420 = vsel %vm416, %v418, %v410
      %vm421 = vcmp.eq.s32.totalorder %v419, 0
      %vm422 = vcmp.eq.s32.totalorder %v420, 0
      %vm423 = vcmp.eq.s32.totalorder %v419, 15
      %vm424 = vcmp.eq.s32.totalorder %v420, 15
      %v426 = vcombine.high %v391, %v391
      %427 = vrot.lane.b32.xlu0 %v391, 16
      %v428 = vpop.permute.xlu0 %427
      %429 = vrot.lane.b32.xlu0 %v426, 16
      %v430 = vpop.permute.xlu0 %429
      %vm431 = vcmask 130048
      %v432 = vsel %vm431, %v428, %v430
      %v435 = vsel %vm431, %v392, %v428
      %437 = vrot.lane.b32.xlu0 %v435, 1
      %v438 = vpop.permute.xlu0 %437
      %439 = vrot.lane.b32.xlu0 %v432, 1
      %v440 = vpop.permute.xlu0 %439
      %vm441 = vcmask 7168
      %v442 = vsel %vm441, %v438, %v440
      %v445 = vsel %vm441, %v435, %v438
      %v446 = vsel %vm421, 1, 0
      %v447 = vsel %vm422, 1, 0
      %vm448 = vcmp.eq.s32.totalorder %v446, 1
      %vm449 = vcmp.eq.s32.totalorder %v447, 1
      %v450 = vsel %vm448, 0.0, %v445
      %v451 = vsel %vm449, 0.0, %v442
      %v452 = vld [vmem:[%s363] sm:$0xff]
      %v453 = vld [vmem:[%s363 + $0x8] sm:$0xff]
      %v454 = vld [vmem:[%s363 + $0x10] sm:$0xff]
      %v455 = vld [vmem:[%s363 + $0x18] sm:$0xff]
      %s456 = scalar_lea.vmem %s363, 32
      %v457 = vld [vmem:[%s456] sm:$0xff]
      %v458 = vld [vmem:[%s456 + $0x8] sm:$0xff]
      %v459 = vld [vmem:[%s456 + $0x10] sm:$0xff]
      %v460 = vld [vmem:[%s456 + $0x18] sm:$0xff]
      %vm461 = vcmask 31744
      %v463 = vsel %vm461, %v457, 0
      %v466 = vsel %vm461, %v458, 0
      %v469 = vsel %vm461, %v459, 0
      %v472 = vsel %vm461, %v460, 0
      %vm474 = vcmask 1043456
      %v475 = vsel %vm474, %v435, 0
      %v477 = vsel %vm474, %v432, 0
      %479 = vmatprep.subr.mxu0 %v477
      %480 = vmatpush1.msra.mxu0 %v475
      %481 = vmatprep.subr.mxu0 0.0
      %482 = vmatpush1.msra.mxu0 0.0
      %483 = vmatprep.subr.mxu0 0.0
      %484 = vmatpush1.msra.mxu0 0.0
      %485 = vmatprep.subr.mxu0 0.0
      %486 = vmatpush1.msra.mxu0 0.0
      %487 = vmatprep.subr.mxu0 0.0
      %488 = vmatpush1.msra.mxu0 0.0
      %489 = vmatprep.subr.mxu0 0.0
      %490 = vmatpush1.msra.mxu0 0.0
      %491 = vmatprep.subr.mxu0 0.0
      %492 = vmatpush1.msra.mxu0 0.0
      %493 = vmatprep.subr.mxu0 0.0
      %494 = vmatpush1.msra.mxu0 0.0
      %495 = vmatprep.subr.mxu0 0.0
      %496 = vmatpush1.msra.mxu0 0.0
      %497 = vmatprep.subr.mxu0 0.0
      %498 = vmatpush1.msra.mxu0 0.0
      %499 = vmatprep.subr.mxu0 0.0
      %500 = vmatpush1.msra.mxu0 0.0
      %501 = vmatprep.subr.mxu0 0.0
      %502 = vmatpush1.msra.mxu0 0.0
      %503 = vmatprep.subr.mxu0 0.0
      %504 = vmatpush1.msra.mxu0 0.0
      %505 = vmatprep.subr.mxu0 0.0
      %506 = vmatpush1.msra.mxu0 0.0
      %507 = vmatprep.subr.mxu0 0.0
      %508 = vmatpush1.msra.mxu0 0.0
      %509 = vmatprep.subr.mxu0 0.0
      %510 = vmatpush1.msra.mxu0 0.0
      %511 = vmatprep.subr.mxu0 0.0
      %512 = vmatpush1.msra.mxu0 0.0
      %513 = vmatprep.subr.mxu0 0.0
      %514 = vmatpush1.msra.mxu0 0.0
      %515 = vmatprep.subr.mxu0 0.0
      %516 = vmatpush1.msra.mxu0 0.0
      %517 = vmatprep.subr.mxu0 0.0
      %518 = vmatpush1.msra.mxu0 0.0
      %519 = vmatprep.subr.mxu0 0.0
      %520 = vmatpush1.msra.mxu0 0.0
      %521 = vmatprep.subr.mxu0 0.0
      %522 = vmatpush1.msra.mxu0 0.0
      %523 = vmatprep.subr.mxu0 0.0
      %524 = vmatpush1.msra.mxu0 0.0
      %525 = vmatprep.subr.mxu0 0.0
      %526 = vmatpush1.msra.mxu0 0.0
      %527 = vmatprep.subr.mxu0 0.0
      %528 = vmatpush1.msra.mxu0 0.0
      %529 = vmatprep.subr.mxu0 0.0
      %530 = vmatpush1.msra.mxu0 0.0
      %531 = vmatprep.subr.mxu0 0.0
      %532 = vmatpush1.msra.mxu0 0.0
      %533 = vmatprep.subr.mxu0 0.0
      %534 = vmatpush1.msra.mxu0 0.0
      %535 = vmatprep.subr.mxu0 0.0
      %536 = vmatpush1.msra.mxu0 0.0
      %537 = vmatprep.subr.mxu0 0.0
      %538 = vmatpush1.msra.mxu0 0.0
      %539 = vmatprep.subr.mxu0 0.0
      %540 = vmatpush1.msra.mxu0 0.0
      %541 = vmatprep.subr.mxu0 0.0
      %542 = vmatpush1.msra.mxu0 0.0
      %543 = vmatprep.mubr.f32.mxu0 0.0
      %544 = vmatmul.mubr.f32.gmra.mrb[0].mxu0 %v463
      %v545 = vpop.f32.mrb[0].mxu0
      %v546 = vadd.f32 0.0, %v545
      %v547 = vpop.f32.mrb[0].mxu0
      %v548 = vadd.f32 0.0, %v547
      %549 = vmatprep.mubr.f32.mxu0 0.0
      %550 = vmatmul.mubr.f32.gmra.mrb[0].mxu0 %v466
      %v551 = vpop.f32.mrb[0].mxu0
      %v552 = vadd.f32 0.0, %v551
      %v553 = vpop.f32.mrb[0].mxu0
      %v554 = vadd.f32 0.0, %v553
      %555 = vmatprep.mubr.f32.mxu0 0.0
      %556 = vmatmul.mubr.f32.gmra.mrb[0].mxu0 %v469
      %v557 = vpop.f32.mrb[0].mxu0
      %v558 = vadd.f32 0.0, %v557
      %v559 = vpop.f32.mrb[0].mxu0
      %v560 = vadd.f32 0.0, %v559
      %561 = vmatprep.mubr.f32.mxu0 0.0
      %562 = vmatmul.mubr.f32.gmra.mrb[0].mxu0 %v472
      %v563 = vpop.f32.mrb[0].mxu0
      %v564 = vadd.f32 0.0, %v563
      %v565 = vpop.f32.mrb[0].mxu0
      %v566 = vadd.f32 0.0, %v565
      %567 = vdwg.mxu0
      %v569 = vsel %vm461, %v452, 0
      %v572 = vsel %vm461, %v453, 0
      %v575 = vsel %vm461, %v454, 0
      %v578 = vsel %vm461, %v455, 0
      %v581 = vsel %vm474, %v450, 0
      %v584 = vsel %vm474, %v451, 0
      %586 = vmatprep.subr.mxu0 %v584
      %587 = vmatpush1.msra.mxu0 %v581
      %588 = vmatprep.subr.mxu0 0.0
      %589 = vmatpush1.msra.mxu0 0.0
      %590 = vmatprep.subr.mxu0 0.0
      %591 = vmatpush1.msra.mxu0 0.0
      %592 = vmatprep.subr.mxu0 0.0
      %593 = vmatpush1.msra.mxu0 0.0
      %594 = vmatprep.subr.mxu0 0.0
      %595 = vmatpush1.msra.mxu0 0.0
      %596 = vmatprep.subr.mxu0 0.0
      %597 = vmatpush1.msra.mxu0 0.0
      %598 = vmatprep.subr.mxu0 0.0
      %599 = vmatpush1.msra.mxu0 0.0
      %600 = vmatprep.subr.mxu0 0.0
      %601 = vmatpush1.msra.mxu0 0.0
      %602 = vmatprep.subr.mxu0 0.0
      %603 = vmatpush1.msra.mxu0 0.0
      %604 = vmatprep.subr.mxu0 0.0
      %605 = vmatpush1.msra.mxu0 0.0
      %606 = vmatprep.subr.mxu0 0.0
      %607 = vmatpush1.msra.mxu0 0.0
      %608 = vmatprep.subr.mxu0 0.0
      %609 = vmatpush1.msra.mxu0 0.0
      %610 = vmatprep.subr.mxu0 0.0
      %611 = vmatpush1.msra.mxu0 0.0
      %612 = vmatprep.subr.mxu0 0.0
      %613 = vmatpush1.msra.mxu0 0.0
      %614 = vmatprep.subr.mxu0 0.0
      %615 = vmatpush1.msra.mxu0 0.0
      %616 = vmatprep.subr.mxu0 0.0
      %617 = vmatpush1.msra.mxu0 0.0
      %618 = vmatprep.subr.mxu0 0.0
      %619 = vmatpush1.msra.mxu0 0.0
      %620 = vmatprep.subr.mxu0 0.0
      %621 = vmatpush1.msra.mxu0 0.0
      %622 = vmatprep.subr.mxu0 0.0
      %623 = vmatpush1.msra.mxu0 0.0
      %624 = vmatprep.subr.mxu0 0.0
      %625 = vmatpush1.msra.mxu0 0.0
      %626 = vmatprep.subr.mxu0 0.0
      %627 = vmatpush1.msra.mxu0 0.0
      %628 = vmatprep.subr.mxu0 0.0
      %629 = vmatpush1.msra.mxu0 0.0
      %630 = vmatprep.subr.mxu0 0.0
      %631 = vmatpush1.msra.mxu0 0.0
      %632 = vmatprep.subr.mxu0 0.0
      %633 = vmatpush1.msra.mxu0 0.0
      %634 = vmatprep.subr.mxu0 0.0
      %635 = vmatpush1.msra.mxu0 0.0
      %636 = vmatprep.subr.mxu0 0.0
      %637 = vmatpush1.msra.mxu0 0.0
      %638 = vmatprep.subr.mxu0 0.0
      %639 = vmatpush1.msra.mxu0 0.0
      %640 = vmatprep.subr.mxu0 0.0
      %641 = vmatpush1.msra.mxu0 0.0
      %642 = vmatprep.subr.mxu0 0.0
      %643 = vmatpush1.msra.mxu0 0.0
      %644 = vmatprep.subr.mxu0 0.0
      %645 = vmatpush1.msra.mxu0 0.0
      %646 = vmatprep.subr.mxu0 0.0
      %647 = vmatpush1.msra.mxu0 0.0
      %648 = vmatprep.subr.mxu0 0.0
      %649 = vmatpush1.msra.mxu0 0.0
      %650 = vmatprep.mubr.f32.mxu0 0.0
      %651 = vmatmul.mubr.f32.gmra.mrb[0].mxu0 %v569
      %v652 = vpop.f32.mrb[0].mxu0
      %v653 = vadd.f32 %v546, %v652
      %v654 = vpop.f32.mrb[0].mxu0
      %v655 = vadd.f32 %v548, %v654
      %656 = vmatprep.mubr.f32.mxu0 0.0
      %657 = vmatmul.mubr.f32.gmra.mrb[0].mxu0 %v572
      %v658 = vpop.f32.mrb[0].mxu0
      %v659 = vadd.f32 %v552, %v658
      %v660 = vpop.f32.mrb[0].mxu0
      %v661 = vadd.f32 %v554, %v660
      %662 = vmatprep.mubr.f32.mxu0 0.0
      %663 = vmatmul.mubr.f32.gmra.mrb[0].mxu0 %v575
      %v664 = vpop.f32.mrb[0].mxu0
      %v665 = vadd.f32 %v558, %v664
      %v666 = vpop.f32.mrb[0].mxu0
      %v667 = vadd.f32 %v560, %v666
      %668 = vmatprep.mubr.f32.mxu0 0.0
      %669 = vmatmul.mubr.f32.gmra.mrb[0].mxu0 %v578
      %v670 = vpop.f32.mrb[0].mxu0
      %v671 = vadd.f32 %v564, %v670
      %v672 = vpop.f32.mrb[0].mxu0
      %v673 = vadd.f32 %v566, %v672
      %674 = vdwg.mxu0
      %675 = vrot.lane.b32.xlu0 %v435, 127
      %v676 = vpop.permute.xlu0 %675
      %677 = vrot.lane.b32.xlu0 %v432, 127
      %v678 = vpop.permute.xlu0 %677
      %vm679 = vcmask 1039360
      %v680 = vsel %vm679, %v676, %v678
      %v683 = vsel %vm679, %v678, %v432
      %v684 = vsel %vm423, 1, 0
      %v685 = vsel %vm424, 1, 0
      %vm686 = vcmp.eq.s32.totalorder %v684, 1
      %vm687 = vcmp.eq.s32.totalorder %v685, 1
      %v688 = vsel %vm686, 0.0, %v680
      %v689 = vsel %vm687, 0.0, %v683
      %s690 = scalar_lea.vmem %s363, 64
      %v691 = vld [vmem:[%s690] sm:$0xff]
      %v692 = vld [vmem:[%s690 + $0x8] sm:$0xff]
      %v693 = vld [vmem:[%s690 + $0x10] sm:$0xff]
      %v694 = vld [vmem:[%s690 + $0x18] sm:$0xff]
      %v696 = vsel %vm461, %v691, 0
      %v699 = vsel %vm461, %v692, 0
      %v702 = vsel %vm461, %v693, 0
      %v705 = vsel %vm461, %v694, 0
      %v708 = vsel %vm474, %v688, 0
      %v711 = vsel %vm474, %v689, 0
      %713 = vmatprep.subr.mxu0 %v711
      %714 = vmatpush1.msra.mxu0 %v708
      %715 = vmatprep.subr.mxu0 0.0
      %716 = vmatpush1.msra.mxu0 0.0
      %717 = vmatprep.subr.mxu0 0.0
      %718 = vmatpush1.msra.mxu0 0.0
      %719 = vmatprep.subr.mxu0 0.0
      %720 = vmatpush1.msra.mxu0 0.0
      %721 = vmatprep.subr.mxu0 0.0
      %722 = vmatpush1.msra.mxu0 0.0
      %723 = vmatprep.subr.mxu0 0.0
      %724 = vmatpush1.msra.mxu0 0.0
      %725 = vmatprep.subr.mxu0 0.0
      %726 = vmatpush1.msra.mxu0 0.0
      %727 = vmatprep.subr.mxu0 0.0
      %728 = vmatpush1.msra.mxu0 0.0
      %729 = vmatprep.subr.mxu0 0.0
      %730 = vmatpush1.msra.mxu0 0.0
      %731 = vmatprep.subr.mxu0 0.0
      %732 = vmatpush1.msra.mxu0 0.0
      %733 = vmatprep.subr.mxu0 0.0
      %734 = vmatpush1.msra.mxu0 0.0
      %735 = vmatprep.subr.mxu0 0.0
      %736 = vmatpush1.msra.mxu0 0.0
      %737 = vmatprep.subr.mxu0 0.0
      %738 = vmatpush1.msra.mxu0 0.0
      %739 = vmatprep.subr.mxu0 0.0
      %740 = vmatpush1.msra.mxu0 0.0
      %741 = vmatprep.subr.mxu0 0.0
      %742 = vmatpush1.msra.mxu0 0.0
      %743 = vmatprep.subr.mxu0 0.0
      %744 = vmatpush1.msra.mxu0 0.0
      %745 = vmatprep.subr.mxu0 0.0
      %746 = vmatpush1.msra.mxu0 0.0
      %747 = vmatprep.subr.mxu0 0.0
      %748 = vmatpush1.msra.mxu0 0.0
      %749 = vmatprep.subr.mxu0 0.0
      %750 = vmatpush1.msra.mxu0 0.0
      %751 = vmatprep.subr.mxu0 0.0
      %752 = vmatpush1.msra.mxu0 0.0
      %753 = vmatprep.subr.mxu0 0.0
      %754 = vmatpush1.msra.mxu0 0.0
      %755 = vmatprep.subr.mxu0 0.0
      %756 = vmatpush1.msra.mxu0 0.0
      %757 = vmatprep.subr.mxu0 0.0
      %758 = vmatpush1.msra.mxu0 0.0
      %759 = vmatprep.subr.mxu0 0.0
      %760 = vmatpush1.msra.mxu0 0.0
      %761 = vmatprep.subr.mxu0 0.0
      %762 = vmatpush1.msra.mxu0 0.0
      %763 = vmatprep.subr.mxu0 0.0
      %764 = vmatpush1.msra.mxu0 0.0
      %765 = vmatprep.subr.mxu0 0.0
      %766 = vmatpush1.msra.mxu0 0.0
      %767 = vmatprep.subr.mxu0 0.0
      %768 = vmatpush1.msra.mxu0 0.0
      %769 = vmatprep.subr.mxu0 0.0
      %770 = vmatpush1.msra.mxu0 0.0
      %771 = vmatprep.subr.mxu0 0.0
      %772 = vmatpush1.msra.mxu0 0.0
      %773 = vmatprep.subr.mxu0 0.0
      %774 = vmatpush1.msra.mxu0 0.0
      %775 = vmatprep.subr.mxu0 0.0
      %776 = vmatpush1.msra.mxu0 0.0
      %777 = vmatprep.mubr.f32.mxu0 0.0
      %778 = vmatmul.mubr.f32.gmra.mrb[0].mxu0 %v696
      %v779 = vpop.f32.mrb[0].mxu0
      %v780 = vadd.f32 0.0, %v779
      %v781 = vpop.f32.mrb[0].mxu0
      %v782 = vadd.f32 0.0, %v781
      %783 = vmatprep.mubr.f32.mxu0 0.0
      %784 = vmatmul.mubr.f32.gmra.mrb[0].mxu0 %v699
      %v785 = vpop.f32.mrb[0].mxu0
      %v786 = vadd.f32 0.0, %v785
      %v787 = vpop.f32.mrb[0].mxu0
      %v788 = vadd.f32 0.0, %v787
      %789 = vmatprep.mubr.f32.mxu0 0.0
      %790 = vmatmul.mubr.f32.gmra.mrb[0].mxu0 %v702
      %v791 = vpop.f32.mrb[0].mxu0
      %v792 = vadd.f32 0.0, %v791
      %v793 = vpop.f32.mrb[0].mxu0
      %v794 = vadd.f32 0.0, %v793
      %795 = vmatprep.mubr.f32.mxu0 0.0
      %796 = vmatmul.mubr.f32.gmra.mrb[0].mxu0 %v705
      %v797 = vpop.f32.mrb[0].mxu0
      %v798 = vadd.f32 0.0, %v797
      %v799 = vpop.f32.mrb[0].mxu0
      %v800 = vadd.f32 0.0, %v799
      %801 = vdwg.mxu0
      %v802 = vadd.f32 %v653, %v780
      %v803 = vadd.f32 %v655, %v782
      %v804 = vadd.f32 %v659, %v786
      %v805 = vadd.f32 %v661, %v788
      %v806 = vadd.f32 %v665, %v792
      %v807 = vadd.f32 %v667, %v794
      %v808 = vadd.f32 %v671, %v798
      %v809 = vadd.f32 %v673, %v800
      %810 = vrot.lane.b32.xlu0 %v391, 1
      %v811 = vpop.permute.xlu0 %810
      %812 = vrot.lane.b32.xlu0 %v426, 1
      %v813 = vpop.permute.xlu0 %812
      %v814 = vsel %vm441, %v811, %v813
      %v817 = vsel %vm441, %v391, %v811
      %v818 = vsel %vm448, 0.0, %v817
      %v819 = vsel %vm449, 0.0, %v814
      %s820 = scalar_lea.vmem %s363, 96
      %v821 = vld [vmem:[%s820] sm:$0xff]
      %v822 = vld [vmem:[%s820 + $0x8] sm:$0xff]
      %v823 = vld [vmem:[%s820 + $0x10] sm:$0xff]
      %v824 = vld [vmem:[%s820 + $0x18] sm:$0xff]
      %v826 = vsel %vm461, %v821, 0
      %v829 = vsel %vm461, %v822, 0
      %v832 = vsel %vm461, %v823, 0
      %v835 = vsel %vm461, %v824, 0
      %v838 = vsel %vm474, %v818, 0
      %v841 = vsel %vm474, %v819, 0
      %843 = vmatprep.subr.mxu0 %v841
      %844 = vmatpush1.msra.mxu0 %v838
      %845 = vmatprep.subr.mxu0 0.0
      %846 = vmatpush1.msra.mxu0 0.0
      %847 = vmatprep.subr.mxu0 0.0
      %848 = vmatpush1.msra.mxu0 0.0
      %849 = vmatprep.subr.mxu0 0.0
      %850 = vmatpush1.msra.mxu0 0.0
      %851 = vmatprep.subr.mxu0 0.0
      %852 = vmatpush1.msra.mxu0 0.0
      %853 = vmatprep.subr.mxu0 0.0
      %854 = vmatpush1.msra.mxu0 0.0
      %855 = vmatprep.subr.mxu0 0.0
      %856 = vmatpush1.msra.mxu0 0.0
      %857 = vmatprep.subr.mxu0 0.0
      %858 = vmatpush1.msra.mxu0 0.0
      %859 = vmatprep.subr.mxu0 0.0
      %860 = vmatpush1.msra.mxu0 0.0
      %861 = vmatprep.subr.mxu0 0.0
      %862 = vmatpush1.msra.mxu0 0.0
      %863 = vmatprep.subr.mxu0 0.0
      %864 = vmatpush1.msra.mxu0 0.0
      %865 = vmatprep.subr.mxu0 0.0
      %866 = vmatpush1.msra.mxu0 0.0
      %867 = vmatprep.subr.mxu0 0.0
      %868 = vmatpush1.msra.mxu0 0.0
      %869 = vmatprep.subr.mxu0 0.0
      %870 = vmatpush1.msra.mxu0 0.0
      %871 = vmatprep.subr.mxu0 0.0
      %872 = vmatpush1.msra.mxu0 0.0
      %873 = vmatprep.subr.mxu0 0.0
      %874 = vmatpush1.msra.mxu0 0.0
      %875 = vmatprep.subr.mxu0 0.0
      %876 = vmatpush1.msra.mxu0 0.0
      %877 = vmatprep.subr.mxu0 0.0
      %878 = vmatpush1.msra.mxu0 0.0
      %879 = vmatprep.subr.mxu0 0.0
      %880 = vmatpush1.msra.mxu0 0.0
      %881 = vmatprep.subr.mxu0 0.0
      %882 = vmatpush1.msra.mxu0 0.0
      %883 = vmatprep.subr.mxu0 0.0
      %884 = vmatpush1.msra.mxu0 0.0
      %885 = vmatprep.subr.mxu0 0.0
      %886 = vmatpush1.msra.mxu0 0.0
      %887 = vmatprep.subr.mxu0 0.0
      %888 = vmatpush1.msra.mxu0 0.0
      %889 = vmatprep.subr.mxu0 0.0
      %890 = vmatpush1.msra.mxu0 0.0
      %891 = vmatprep.subr.mxu0 0.0
      %892 = vmatpush1.msra.mxu0 0.0
      %893 = vmatprep.subr.mxu0 0.0
      %894 = vmatpush1.msra.mxu0 0.0
      %895 = vmatprep.subr.mxu0 0.0
      %896 = vmatpush1.msra.mxu0 0.0
      %897 = vmatprep.subr.mxu0 0.0
      %898 = vmatpush1.msra.mxu0 0.0
      %899 = vmatprep.subr.mxu0 0.0
      %900 = vmatpush1.msra.mxu0 0.0
      %901 = vmatprep.subr.mxu0 0.0
      %902 = vmatpush1.msra.mxu0 0.0
      %903 = vmatprep.subr.mxu0 0.0
      %904 = vmatpush1.msra.mxu0 0.0
      %905 = vmatprep.subr.mxu0 0.0
      %906 = vmatpush1.msra.mxu0 0.0
      %907 = vmatprep.mubr.f32.mxu0 0.0
      %908 = vmatmul.mubr.f32.gmra.mrb[0].mxu0 %v826
      %v909 = vpop.f32.mrb[0].mxu0
      %v910 = vadd.f32 0.0, %v909
      %v911 = vpop.f32.mrb[0].mxu0
      %v912 = vadd.f32 0.0, %v911
      %913 = vmatprep.mubr.f32.mxu0 0.0
      %914 = vmatmul.mubr.f32.gmra.mrb[0].mxu0 %v829
      %v915 = vpop.f32.mrb[0].mxu0
      %v916 = vadd.f32 0.0, %v915
      %v917 = vpop.f32.mrb[0].mxu0
      %v918 = vadd.f32 0.0, %v917
      %919 = vmatprep.mubr.f32.mxu0 0.0
      %920 = vmatmul.mubr.f32.gmra.mrb[0].mxu0 %v832
      %v921 = vpop.f32.mrb[0].mxu0
      %v922 = vadd.f32 0.0, %v921
      %v923 = vpop.f32.mrb[0].mxu0
      %v924 = vadd.f32 0.0, %v923
      %925 = vmatprep.mubr.f32.mxu0 0.0
      %926 = vmatmul.mubr.f32.gmra.mrb[0].mxu0 %v835
      %v927 = vpop.f32.mrb[0].mxu0
      %v928 = vadd.f32 0.0, %v927
      %v929 = vpop.f32.mrb[0].mxu0
      %v930 = vadd.f32 0.0, %v929
      %931 = vdwg.mxu0
      %v932 = vadd.f32 %v802, %v910
      %v933 = vadd.f32 %v803, %v912
      %v934 = vadd.f32 %v804, %v916
      %v935 = vadd.f32 %v805, %v918
      %v936 = vadd.f32 %v806, %v922
      %v937 = vadd.f32 %v807, %v924
      %v938 = vadd.f32 %v808, %v928
      %v939 = vadd.f32 %v809, %v930
      %s940 = scalar_lea.vmem %s363, 128
      %v941 = vld [vmem:[%s940] sm:$0xff]
      %v942 = vld [vmem:[%s940 + $0x8] sm:$0xff]
      %v943 = vld [vmem:[%s940 + $0x10] sm:$0xff]
      %v944 = vld [vmem:[%s940 + $0x18] sm:$0xff]
      %v946 = vsel %vm461, %v941, 0
      %v949 = vsel %vm461, %v942, 0
      %v952 = vsel %vm461, %v943, 0
      %v955 = vsel %vm461, %v944, 0
      %v957 = vsel %vm474, %v391, 0
      %v959 = vsel %vm474, %v426, 0
      %961 = vmatprep.subr.mxu0 %v959
      %962 = vmatpush1.msra.mxu0 %v957
      %963 = vmatprep.subr.mxu0 0.0
      %964 = vmatpush1.msra.mxu0 0.0
      %965 = vmatprep.subr.mxu0 0.0
      %966 = vmatpush1.msra.mxu0 0.0
      %967 = vmatprep.subr.mxu0 0.0
      %968 = vmatpush1.msra.mxu0 0.0
      %969 = vmatprep.subr.mxu0 0.0
      %970 = vmatpush1.msra.mxu0 0.0
      %971 = vmatprep.subr.mxu0 0.0
      %972 = vmatpush1.msra.mxu0 0.0
      %973 = vmatprep.subr.mxu0 0.0
      %974 = vmatpush1.msra.mxu0 0.0
      %975 = vmatprep.subr.mxu0 0.0
      %976 = vmatpush1.msra.mxu0 0.0
      %977 = vmatprep.subr.mxu0 0.0
      %978 = vmatpush1.msra.mxu0 0.0
      %979 = vmatprep.subr.mxu0 0.0
      %980 = vmatpush1.msra.mxu0 0.0
      %981 = vmatprep.subr.mxu0 0.0
      %982 = vmatpush1.msra.mxu0 0.0
      %983 = vmatprep.subr.mxu0 0.0
      %984 = vmatpush1.msra.mxu0 0.0
      %985 = vmatprep.subr.mxu0 0.0
      %986 = vmatpush1.msra.mxu0 0.0
      %987 = vmatprep.subr.mxu0 0.0
      %988 = vmatpush1.msra.mxu0 0.0
      %989 = vmatprep.subr.mxu0 0.0
      %990 = vmatpush1.msra.mxu0 0.0
      %991 = vmatprep.subr.mxu0 0.0
      %992 = vmatpush1.msra.mxu0 0.0
      %993 = vmatprep.subr.mxu0 0.0
      %994 = vmatpush1.msra.mxu0 0.0
      %995 = vmatprep.subr.mxu0 0.0
      %996 = vmatpush1.msra.mxu0 0.0
      %997 = vmatprep.subr.mxu0 0.0
      %998 = vmatpush1.msra.mxu0 0.0
      %999 = vmatprep.subr.mxu0 0.0
      %1000 = vmatpush1.msra.mxu0 0.0
      %1001 = vmatprep.subr.mxu0 0.0
      %1002 = vmatpush1.msra.mxu0 0.0
      %1003 = vmatprep.subr.mxu0 0.0
      %1004 = vmatpush1.msra.mxu0 0.0
      %1005 = vmatprep.subr.mxu0 0.0
      %1006 = vmatpush1.msra.mxu0 0.0
      %1007 = vmatprep.subr.mxu0 0.0
      %1008 = vmatpush1.msra.mxu0 0.0
      %1009 = vmatprep.subr.mxu0 0.0
      %1010 = vmatpush1.msra.mxu0 0.0
      %1011 = vmatprep.subr.mxu0 0.0
      %1012 = vmatpush1.msra.mxu0 0.0
      %1013 = vmatprep.subr.mxu0 0.0
      %1014 = vmatpush1.msra.mxu0 0.0
      %1015 = vmatprep.subr.mxu0 0.0
      %1016 = vmatpush1.msra.mxu0 0.0
      %1017 = vmatprep.subr.mxu0 0.0
      %1018 = vmatpush1.msra.mxu0 0.0
      %1019 = vmatprep.subr.mxu0 0.0
      %1020 = vmatpush1.msra.mxu0 0.0
      %1021 = vmatprep.subr.mxu0 0.0
      %1022 = vmatpush1.msra.mxu0 0.0
      %1023 = vmatprep.subr.mxu0 0.0
      %1024 = vmatpush1.msra.mxu0 0.0
      %1025 = vmatprep.mubr.f32.mxu0 0.0
      %1026 = vmatmul.mubr.f32.gmra.mrb[0].mxu0 %v946
      %v1027 = vpop.f32.mrb[0].mxu0
      %v1028 = vadd.f32 0.0, %v1027
      %v1029 = vpop.f32.mrb[0].mxu0
      %v1030 = vadd.f32 0.0, %v1029
      %1031 = vmatprep.mubr.f32.mxu0 0.0
      %1032 = vmatmul.mubr.f32.gmra.mrb[0].mxu0 %v949
      %v1033 = vpop.f32.mrb[0].mxu0
      %v1034 = vadd.f32 0.0, %v1033
      %v1035 = vpop.f32.mrb[0].mxu0
      %v1036 = vadd.f32 0.0, %v1035
      %1037 = vmatprep.mubr.f32.mxu0 0.0
      %1038 = vmatmul.mubr.f32.gmra.mrb[0].mxu0 %v952
      %v1039 = vpop.f32.mrb[0].mxu0
      %v1040 = vadd.f32 0.0, %v1039
      %v1041 = vpop.f32.mrb[0].mxu0
      %v1042 = vadd.f32 0.0, %v1041
      %1043 = vmatprep.mubr.f32.mxu0 0.0
      %1044 = vmatmul.mubr.f32.gmra.mrb[0].mxu0 %v955
      %v1045 = vpop.f32.mrb[0].mxu0
      %v1046 = vadd.f32 0.0, %v1045
      %v1047 = vpop.f32.mrb[0].mxu0
      %v1048 = vadd.f32 0.0, %v1047
      %1049 = vdwg.mxu0
      %v1050 = vadd.f32 %v932, %v1028
      %v1051 = vadd.f32 %v933, %v1030
      %v1052 = vadd.f32 %v934, %v1034
      %v1053 = vadd.f32 %v935, %v1036
      %v1054 = vadd.f32 %v936, %v1040
      %v1055 = vadd.f32 %v937, %v1042
      %v1056 = vadd.f32 %v938, %v1046
      %v1057 = vadd.f32 %v939, %v1048
      %1058 = vrot.lane.b32.xlu0 %v391, 127
      %v1059 = vpop.permute.xlu0 %1058
      %1060 = vrot.lane.b32.xlu0 %v426, 127
      %v1061 = vpop.permute.xlu0 %1060
      %v1062 = vsel %vm679, %v1059, %v1061
      %v1066 = vsel %vm679, %v1061, %v426
      %v1067 = vsel %vm686, 0.0, %v1062
      %v1068 = vsel %vm687, 0.0, %v1066
      %s1069 = scalar_lea.vmem %s363, 160
      %v1070 = vld [vmem:[%s1069] sm:$0xff]
      %v1071 = vld [vmem:[%s1069 + $0x8] sm:$0xff]
      %v1072 = vld [vmem:[%s1069 + $0x10] sm:$0xff]
      %v1073 = vld [vmem:[%s1069 + $0x18] sm:$0xff]
      %v1075 = vsel %vm461, %v1070, 0
      %v1078 = vsel %vm461, %v1071, 0
      %v1081 = vsel %vm461, %v1072, 0
      %v1084 = vsel %vm461, %v1073, 0
      %v1087 = vsel %vm474, %v1067, 0
      %v1090 = vsel %vm474, %v1068, 0
      %1092 = vmatprep.subr.mxu0 %v1090
      %1093 = vmatpush1.msra.mxu0 %v1087
      %1094 = vmatprep.subr.mxu0 0.0
      %1095 = vmatpush1.msra.mxu0 0.0
      %1096 = vmatprep.subr.mxu0 0.0
      %1097 = vmatpush1.msra.mxu0 0.0
      %1098 = vmatprep.subr.mxu0 0.0
      %1099 = vmatpush1.msra.mxu0 0.0
      %1100 = vmatprep.subr.mxu0 0.0
      %1101 = vmatpush1.msra.mxu0 0.0
      %1102 = vmatprep.subr.mxu0 0.0
      %1103 = vmatpush1.msra.mxu0 0.0
      %1104 = vmatprep.subr.mxu0 0.0
      %1105 = vmatpush1.msra.mxu0 0.0
      %1106 = vmatprep.subr.mxu0 0.0
      %1107 = vmatpush1.msra.mxu0 0.0
      %1108 = vmatprep.subr.mxu0 0.0
      %1109 = vmatpush1.msra.mxu0 0.0
      %1110 = vmatprep.subr.mxu0 0.0
      %1111 = vmatpush1.msra.mxu0 0.0
      %1112 = vmatprep.subr.mxu0 0.0
      %1113 = vmatpush1.msra.mxu0 0.0
      %1114 = vmatprep.subr.mxu0 0.0
      %1115 = vmatpush1.msra.mxu0 0.0
      %1116 = vmatprep.subr.mxu0 0.0
      %1117 = vmatpush1.msra.mxu0 0.0
      %1118 = vmatprep.subr.mxu0 0.0
      %1119 = vmatpush1.msra.mxu0 0.0
      %1120 = vmatprep.subr.mxu0 0.0
      %1121 = vmatpush1.msra.mxu0 0.0
      %1122 = vmatprep.subr.mxu0 0.0
      %1123 = vmatpush1.msra.mxu0 0.0
      %1124 = vmatprep.subr.mxu0 0.0
      %1125 = vmatpush1.msra.mxu0 0.0
      %1126 = vmatprep.subr.mxu0 0.0
      %1127 = vmatpush1.msra.mxu0 0.0
      %1128 = vmatprep.subr.mxu0 0.0
      %1129 = vmatpush1.msra.mxu0 0.0
      %1130 = vmatprep.subr.mxu0 0.0
      %1131 = vmatpush1.msra.mxu0 0.0
      %1132 = vmatprep.subr.mxu0 0.0
      %1133 = vmatpush1.msra.mxu0 0.0
      %1134 = vmatprep.subr.mxu0 0.0
      %1135 = vmatpush1.msra.mxu0 0.0
      %1136 = vmatprep.subr.mxu0 0.0
      %1137 = vmatpush1.msra.mxu0 0.0
      %1138 = vmatprep.subr.mxu0 0.0
      %1139 = vmatpush1.msra.mxu0 0.0
      %1140 = vmatprep.subr.mxu0 0.0
      %1141 = vmatpush1.msra.mxu0 0.0
      %1142 = vmatprep.subr.mxu0 0.0
      %1143 = vmatpush1.msra.mxu0 0.0
      %1144 = vmatprep.subr.mxu0 0.0
      %1145 = vmatpush1.msra.mxu0 0.0
      %1146 = vmatprep.subr.mxu0 0.0
      %1147 = vmatpush1.msra.mxu0 0.0
      %1148 = vmatprep.subr.mxu0 0.0
      %1149 = vmatpush1.msra.mxu0 0.0
      %1150 = vmatprep.subr.mxu0 0.0
      %1151 = vmatpush1.msra.mxu0 0.0
      %1152 = vmatprep.subr.mxu0 0.0
      %1153 = vmatpush1.msra.mxu0 0.0
      %1154 = vmatprep.subr.mxu0 0.0
      %1155 = vmatpush1.msra.mxu0 0.0
      %1156 = vmatprep.mubr.f32.mxu0 0.0
      %1157 = vmatmul.mubr.f32.gmra.mrb[0].mxu0 %v1075
      %v1158 = vpop.f32.mrb[0].mxu0
      %v1159 = vadd.f32 0.0, %v1158
      %v1160 = vpop.f32.mrb[0].mxu0
      %v1161 = vadd.f32 0.0, %v1160
      %1162 = vmatprep.mubr.f32.mxu0 0.0
      %1163 = vmatmul.mubr.f32.gmra.mrb[0].mxu0 %v1078
      %v1164 = vpop.f32.mrb[0].mxu0
      %v1165 = vadd.f32 0.0, %v1164
      %v1166 = vpop.f32.mrb[0].mxu0
      %v1167 = vadd.f32 0.0, %v1166
      %1168 = vmatprep.mubr.f32.mxu0 0.0
      %1169 = vmatmul.mubr.f32.gmra.mrb[0].mxu0 %v1081
      %v1170 = vpop.f32.mrb[0].mxu0
      %v1171 = vadd.f32 0.0, %v1170
      %v1172 = vpop.f32.mrb[0].mxu0
      %v1173 = vadd.f32 0.0, %v1172
      %1174 = vmatprep.mubr.f32.mxu0 0.0
      %1175 = vmatmul.mubr.f32.gmra.mrb[0].mxu0 %v1084
      %v1176 = vpop.f32.mrb[0].mxu0
      %v1177 = vadd.f32 0.0, %v1176
      %v1178 = vpop.f32.mrb[0].mxu0
      %v1179 = vadd.f32 0.0, %v1178
      %1180 = vdwg.mxu0
      %v1181 = vadd.f32 %v1050, %v1159
      %v1182 = vadd.f32 %v1051, %v1161
      %v1183 = vadd.f32 %v1052, %v1165
      %v1184 = vadd.f32 %v1053, %v1167
      %v1185 = vadd.f32 %v1054, %v1171
      %v1186 = vadd.f32 %v1055, %v1173
      %v1187 = vadd.f32 %v1056, %v1177
      %v1188 = vadd.f32 %v1057, %v1179
      %1189 = vrot.lane.b32.xlu0 %v391, 112
      %v1190 = vpop.permute.xlu0 %1189
      %1191 = vrot.lane.b32.xlu0 %v426, 112
      %v1192 = vpop.permute.xlu0 %1191
      %vm1193 = vcmask 916480
      %v1194 = vsel %vm1193, %v1190, %v1192
      %1198 = vrot.lane.b32.xlu0 %v393, 112
      %v1199 = vpop.permute.xlu0 %1198
      %v1201 = vsel %vm1193, %v1192, %v1199
      %1203 = vrot.lane.b32.xlu0 %v1194, 1
      %v1204 = vpop.permute.xlu0 %1203
      %1205 = vrot.lane.b32.xlu0 %v1201, 1
      %v1206 = vpop.permute.xlu0 %1205
      %v1207 = vsel %vm441, %v1204, %v1206
      %v1210 = vsel %vm441, %v1194, %v1204
      %v1211 = vsel %vm448, 0.0, %v1210
      %v1212 = vsel %vm449, 0.0, %v1207
      %s1213 = scalar_lea.vmem %s363, 192
      %v1214 = vld [vmem:[%s1213] sm:$0xff]
      %v1215 = vld [vmem:[%s1213 + $0x8] sm:$0xff]
      %v1216 = vld [vmem:[%s1213 + $0x10] sm:$0xff]
      %v1217 = vld [vmem:[%s1213 + $0x18] sm:$0xff]
      %v1219 = vsel %vm461, %v1214, 0
      %v1222 = vsel %vm461, %v1215, 0
      %v1225 = vsel %vm461, %v1216, 0
      %v1228 = vsel %vm461, %v1217, 0
      %v1231 = vsel %vm474, %v1211, 0
      %v1234 = vsel %vm474, %v1212, 0
      %1236 = vmatprep.subr.mxu0 %v1234
      %1237 = vmatpush1.msra.mxu0 %v1231
      %1238 = vmatprep.subr.mxu0 0.0
      %1239 = vmatpush1.msra.mxu0 0.0
      %1240 = vmatprep.subr.mxu0 0.0
      %1241 = vmatpush1.msra.mxu0 0.0
      %1242 = vmatprep.subr.mxu0 0.0
      %1243 = vmatpush1.msra.mxu0 0.0
      %1244 = vmatprep.subr.mxu0 0.0
      %1245 = vmatpush1.msra.mxu0 0.0
      %1246 = vmatprep.subr.mxu0 0.0
      %1247 = vmatpush1.msra.mxu0 0.0
      %1248 = vmatprep.subr.mxu0 0.0
      %1249 = vmatpush1.msra.mxu0 0.0
      %1250 = vmatprep.subr.mxu0 0.0
      %1251 = vmatpush1.msra.mxu0 0.0
      %1252 = vmatprep.subr.mxu0 0.0
      %1253 = vmatpush1.msra.mxu0 0.0
      %1254 = vmatprep.subr.mxu0 0.0
      %1255 = vmatpush1.msra.mxu0 0.0
      %1256 = vmatprep.subr.mxu0 0.0
      %1257 = vmatpush1.msra.mxu0 0.0
      %1258 = vmatprep.subr.mxu0 0.0
      %1259 = vmatpush1.msra.mxu0 0.0
      %1260 = vmatprep.subr.mxu0 0.0
      %1261 = vmatpush1.msra.mxu0 0.0
      %1262 = vmatprep.subr.mxu0 0.0
      %1263 = vmatpush1.msra.mxu0 0.0
      %1264 = vmatprep.subr.mxu0 0.0
      %1265 = vmatpush1.msra.mxu0 0.0
      %1266 = vmatprep.subr.mxu0 0.0
      %1267 = vmatpush1.msra.mxu0 0.0
      %1268 = vmatprep.subr.mxu0 0.0
      %1269 = vmatpush1.msra.mxu0 0.0
      %1270 = vmatprep.subr.mxu0 0.0
      %1271 = vmatpush1.msra.mxu0 0.0
      %1272 = vmatprep.subr.mxu0 0.0
      %1273 = vmatpush1.msra.mxu0 0.0
      %1274 = vmatprep.subr.mxu0 0.0
      %1275 = vmatpush1.msra.mxu0 0.0
      %1276 = vmatprep.subr.mxu0 0.0
      %1277 = vmatpush1.msra.mxu0 0.0
      %1278 = vmatprep.subr.mxu0 0.0
      %1279 = vmatpush1.msra.mxu0 0.0
      %1280 = vmatprep.subr.mxu0 0.0
      %1281 = vmatpush1.msra.mxu0 0.0
      %1282 = vmatprep.subr.mxu0 0.0
      %1283 = vmatpush1.msra.mxu0 0.0
      %1284 = vmatprep.subr.mxu0 0.0
      %1285 = vmatpush1.msra.mxu0 0.0
      %1286 = vmatprep.subr.mxu0 0.0
      %1287 = vmatpush1.msra.mxu0 0.0
      %1288 = vmatprep.subr.mxu0 0.0
      %1289 = vmatpush1.msra.mxu0 0.0
      %1290 = vmatprep.subr.mxu0 0.0
      %1291 = vmatpush1.msra.mxu0 0.0
      %1292 = vmatprep.subr.mxu0 0.0
      %1293 = vmatpush1.msra.mxu0 0.0
      %1294 = vmatprep.subr.mxu0 0.0
      %1295 = vmatpush1.msra.mxu0 0.0
      %1296 = vmatprep.subr.mxu0 0.0
      %1297 = vmatpush1.msra.mxu0 0.0
      %1298 = vmatprep.subr.mxu0 0.0
      %1299 = vmatpush1.msra.mxu0 0.0
      %1300 = vmatprep.mubr.f32.mxu0 0.0
      %1301 = vmatmul.mubr.f32.gmra.mrb[0].mxu0 %v1219
      %v1302 = vpop.f32.mrb[0].mxu0
      %v1303 = vadd.f32 0.0, %v1302
      %v1304 = vpop.f32.mrb[0].mxu0
      %v1305 = vadd.f32 0.0, %v1304
      %1306 = vmatprep.mubr.f32.mxu0 0.0
      %1307 = vmatmul.mubr.f32.gmra.mrb[0].mxu0 %v1222
      %v1308 = vpop.f32.mrb[0].mxu0
      %v1309 = vadd.f32 0.0, %v1308
      %v1310 = vpop.f32.mrb[0].mxu0
      %v1311 = vadd.f32 0.0, %v1310
      %1312 = vmatprep.mubr.f32.mxu0 0.0
      %1313 = vmatmul.mubr.f32.gmra.mrb[0].mxu0 %v1225
      %v1314 = vpop.f32.mrb[0].mxu0
      %v1315 = vadd.f32 0.0, %v1314
      %v1316 = vpop.f32.mrb[0].mxu0
      %v1317 = vadd.f32 0.0, %v1316
      %1318 = vmatprep.mubr.f32.mxu0 0.0
      %1319 = vmatmul.mubr.f32.gmra.mrb[0].mxu0 %v1228
      %v1320 = vpop.f32.mrb[0].mxu0
      %v1321 = vadd.f32 0.0, %v1320
      %v1322 = vpop.f32.mrb[0].mxu0
      %v1323 = vadd.f32 0.0, %v1322
      %1324 = vdwg.mxu0
      %v1325 = vadd.f32 %v1181, %v1303
      %v1326 = vadd.f32 %v1182, %v1305
      %v1327 = vadd.f32 %v1183, %v1309
      %v1328 = vadd.f32 %v1184, %v1311
      %v1329 = vadd.f32 %v1185, %v1315
      %v1330 = vadd.f32 %v1186, %v1317
      %v1331 = vadd.f32 %v1187, %v1321
      %v1332 = vadd.f32 %v1188, %v1323
      %s1333 = scalar_lea.vmem %s363, 224
      %v1334 = vld [vmem:[%s1333] sm:$0xff]
      %v1335 = vld [vmem:[%s1333 + $0x8] sm:$0xff]
      %v1336 = vld [vmem:[%s1333 + $0x10] sm:$0xff]
      %v1337 = vld [vmem:[%s1333 + $0x18] sm:$0xff]
      %v1339 = vsel %vm461, %v1334, 0
      %v1342 = vsel %vm461, %v1335, 0
      %v1345 = vsel %vm461, %v1336, 0
      %v1348 = vsel %vm461, %v1337, 0
      %v1350 = vsel %vm474, %v1194, 0
      %v1352 = vsel %vm474, %v1201, 0
      %1354 = vmatprep.subr.mxu0 %v1352
      %1355 = vmatpush1.msra.mxu0 %v1350
      %1356 = vmatprep.subr.mxu0 0.0
      %1357 = vmatpush1.msra.mxu0 0.0
      %1358 = vmatprep.subr.mxu0 0.0
      %1359 = vmatpush1.msra.mxu0 0.0
      %1360 = vmatprep.subr.mxu0 0.0
      %1361 = vmatpush1.msra.mxu0 0.0
      %1362 = vmatprep.subr.mxu0 0.0
      %1363 = vmatpush1.msra.mxu0 0.0
      %1364 = vmatprep.subr.mxu0 0.0
      %1365 = vmatpush1.msra.mxu0 0.0
      %1366 = vmatprep.subr.mxu0 0.0
      %1367 = vmatpush1.msra.mxu0 0.0
      %1368 = vmatprep.subr.mxu0 0.0
      %1369 = vmatpush1.msra.mxu0 0.0
      %1370 = vmatprep.subr.mxu0 0.0
      %1371 = vmatpush1.msra.mxu0 0.0
      %1372 = vmatprep.subr.mxu0 0.0
      %1373 = vmatpush1.msra.mxu0 0.0
      %1374 = vmatprep.subr.mxu0 0.0
      %1375 = vmatpush1.msra.mxu0 0.0
      %1376 = vmatprep.subr.mxu0 0.0
      %1377 = vmatpush1.msra.mxu0 0.0
      %1378 = vmatprep.subr.mxu0 0.0
      %1379 = vmatpush1.msra.mxu0 0.0
      %1380 = vmatprep.subr.mxu0 0.0
      %1381 = vmatpush1.msra.mxu0 0.0
      %1382 = vmatprep.subr.mxu0 0.0
      %1383 = vmatpush1.msra.mxu0 0.0
      %1384 = vmatprep.subr.mxu0 0.0
      %1385 = vmatpush1.msra.mxu0 0.0
      %1386 = vmatprep.subr.mxu0 0.0
      %1387 = vmatpush1.msra.mxu0 0.0
      %1388 = vmatprep.subr.mxu0 0.0
      %1389 = vmatpush1.msra.mxu0 0.0
      %1390 = vmatprep.subr.mxu0 0.0
      %1391 = vmatpush1.msra.mxu0 0.0
      %1392 = vmatprep.subr.mxu0 0.0
      %1393 = vmatpush1.msra.mxu0 0.0
      %1394 = vmatprep.subr.mxu0 0.0
      %1395 = vmatpush1.msra.mxu0 0.0
      %1396 = vmatprep.subr.mxu0 0.0
      %1397 = vmatpush1.msra.mxu0 0.0
      %1398 = vmatprep.subr.mxu0 0.0
      %1399 = vmatpush1.msra.mxu0 0.0
      %1400 = vmatprep.subr.mxu0 0.0
      %1401 = vmatpush1.msra.mxu0 0.0
      %1402 = vmatprep.subr.mxu0 0.0
      %1403 = vmatpush1.msra.mxu0 0.0
      %1404 = vmatprep.subr.mxu0 0.0
      %1405 = vmatpush1.msra.mxu0 0.0
      %1406 = vmatprep.subr.mxu0 0.0
      %1407 = vmatpush1.msra.mxu0 0.0
      %1408 = vmatprep.subr.mxu0 0.0
      %1409 = vmatpush1.msra.mxu0 0.0
      %1410 = vmatprep.subr.mxu0 0.0
      %1411 = vmatpush1.msra.mxu0 0.0
      %1412 = vmatprep.subr.mxu0 0.0
      %1413 = vmatpush1.msra.mxu0 0.0
      %1414 = vmatprep.subr.mxu0 0.0
      %1415 = vmatpush1.msra.mxu0 0.0
      %1416 = vmatprep.subr.mxu0 0.0
      %1417 = vmatpush1.msra.mxu0 0.0
      %1418 = vmatprep.mubr.f32.mxu0 0.0
      %1419 = vmatmul.mubr.f32.gmra.mrb[0].mxu0 %v1339
      %v1420 = vpop.f32.mrb[0].mxu0
      %v1421 = vadd.f32 0.0, %v1420
      %v1422 = vpop.f32.mrb[0].mxu0
      %v1423 = vadd.f32 0.0, %v1422
      %1424 = vmatprep.mubr.f32.mxu0 0.0
      %1425 = vmatmul.mubr.f32.gmra.mrb[0].mxu0 %v1342
      %v1426 = vpop.f32.mrb[0].mxu0
      %v1427 = vadd.f32 0.0, %v1426
      %v1428 = vpop.f32.mrb[0].mxu0
      %v1429 = vadd.f32 0.0, %v1428
      %1430 = vmatprep.mubr.f32.mxu0 0.0
      %1431 = vmatmul.mubr.f32.gmra.mrb[0].mxu0 %v1345
      %v1432 = vpop.f32.mrb[0].mxu0
      %v1433 = vadd.f32 0.0, %v1432
      %v1434 = vpop.f32.mrb[0].mxu0
      %v1435 = vadd.f32 0.0, %v1434
      %1436 = vmatprep.mubr.f32.mxu0 0.0
      %1437 = vmatmul.mubr.f32.gmra.mrb[0].mxu0 %v1348
      %v1438 = vpop.f32.mrb[0].mxu0
      %v1439 = vadd.f32 0.0, %v1438
      %v1440 = vpop.f32.mrb[0].mxu0
      %v1441 = vadd.f32 0.0, %v1440
      %1442 = vdwg.mxu0
      %v1443 = vadd.f32 %v1325, %v1421
      %v1444 = vadd.f32 %v1326, %v1423
      %v1445 = vadd.f32 %v1327, %v1427
      %v1446 = vadd.f32 %v1328, %v1429
      %v1447 = vadd.f32 %v1329, %v1433
      %v1448 = vadd.f32 %v1330, %v1435
      %v1449 = vadd.f32 %v1331, %v1439
      %v1450 = vadd.f32 %v1332, %v1441
      %1451 = vrot.lane.b32.xlu0 %v1194, 127
      %v1452 = vpop.permute.xlu0 %1451
      %1453 = vrot.lane.b32.xlu0 %v1201, 127
      %v1454 = vpop.permute.xlu0 %1453
      %v1455 = vsel %vm679, %v1452, %v1454
      %v1458 = vsel %vm679, %v1454, %v1201
      %v1459 = vsel %vm686, 0.0, %v1455
      %v1460 = vsel %vm687, 0.0, %v1458
      %s1461 = scalar_lea.vmem %s363, 256
      %v1462 = vld [vmem:[%s1461] sm:$0xff]
      %v1463 = vld [vmem:[%s1461 + $0x8] sm:$0xff]
      %v1464 = vld [vmem:[%s1461 + $0x10] sm:$0xff]
      %v1465 = vld [vmem:[%s1461 + $0x18] sm:$0xff]
      %v1467 = vsel %vm461, %v1462, 0
      %v1470 = vsel %vm461, %v1463, 0
      %v1473 = vsel %vm461, %v1464, 0
      %v1476 = vsel %vm461, %v1465, 0
      %v1479 = vsel %vm474, %v1459, 0
      %v1482 = vsel %vm474, %v1460, 0
      %1484 = vmatprep.subr.mxu0 %v1482
      %1485 = vmatpush1.msra.mxu0 %v1479
      %1486 = vmatprep.subr.mxu0 0.0
      %1487 = vmatpush1.msra.mxu0 0.0
      %1488 = vmatprep.subr.mxu0 0.0
      %1489 = vmatpush1.msra.mxu0 0.0
      %1490 = vmatprep.subr.mxu0 0.0
      %1491 = vmatpush1.msra.mxu0 0.0
      %1492 = vmatprep.subr.mxu0 0.0
      %1493 = vmatpush1.msra.mxu0 0.0
      %1494 = vmatprep.subr.mxu0 0.0
      %1495 = vmatpush1.msra.mxu0 0.0
      %1496 = vmatprep.subr.mxu0 0.0
      %1497 = vmatpush1.msra.mxu0 0.0
      %1498 = vmatprep.subr.mxu0 0.0
      %1499 = vmatpush1.msra.mxu0 0.0
      %1500 = vmatprep.subr.mxu0 0.0
      %1501 = vmatpush1.msra.mxu0 0.0
      %1502 = vmatprep.subr.mxu0 0.0
      %1503 = vmatpush1.msra.mxu0 0.0
      %1504 = vmatprep.subr.mxu0 0.0
      %1505 = vmatpush1.msra.mxu0 0.0
      %1506 = vmatprep.subr.mxu0 0.0
      %1507 = vmatpush1.msra.mxu0 0.0
      %1508 = vmatprep.subr.mxu0 0.0
      %1509 = vmatpush1.msra.mxu0 0.0
      %1510 = vmatprep.subr.mxu0 0.0
      %1511 = vmatpush1.msra.mxu0 0.0
      %1512 = vmatprep.subr.mxu0 0.0
      %1513 = vmatpush1.msra.mxu0 0.0
      %1514 = vmatprep.subr.mxu0 0.0
      %1515 = vmatpush1.msra.mxu0 0.0
      %1516 = vmatprep.subr.mxu0 0.0
      %1517 = vmatpush1.msra.mxu0 0.0
      %1518 = vmatprep.subr.mxu0 0.0
      %1519 = vmatpush1.msra.mxu0 0.0
      %1520 = vmatprep.subr.mxu0 0.0
      %1521 = vmatpush1.msra.mxu0 0.0
      %1522 = vmatprep.subr.mxu0 0.0
      %1523 = vmatpush1.msra.mxu0 0.0
      %1524 = vmatprep.subr.mxu0 0.0
      %1525 = vmatpush1.msra.mxu0 0.0
      %1526 = vmatprep.subr.mxu0 0.0
      %1527 = vmatpush1.msra.mxu0 0.0
      %1528 = vmatprep.subr.mxu0 0.0
      %1529 = vmatpush1.msra.mxu0 0.0
      %1530 = vmatprep.subr.mxu0 0.0
      %1531 = vmatpush1.msra.mxu0 0.0
      %1532 = vmatprep.subr.mxu0 0.0
      %1533 = vmatpush1.msra.mxu0 0.0
      %1534 = vmatprep.subr.mxu0 0.0
      %1535 = vmatpush1.msra.mxu0 0.0
      %1536 = vmatprep.subr.mxu0 0.0
      %1537 = vmatpush1.msra.mxu0 0.0
      %1538 = vmatprep.subr.mxu0 0.0
      %1539 = vmatpush1.msra.mxu0 0.0
      %1540 = vmatprep.subr.mxu0 0.0
      %1541 = vmatpush1.msra.mxu0 0.0
      %1542 = vmatprep.subr.mxu0 0.0
      %1543 = vmatpush1.msra.mxu0 0.0
      %1544 = vmatprep.subr.mxu0 0.0
      %1545 = vmatpush1.msra.mxu0 0.0
      %1546 = vmatprep.subr.mxu0 0.0
      %1547 = vmatpush1.msra.mxu0 0.0
      %1548 = vmatprep.mubr.f32.mxu0 0.0
      %1549 = vmatmul.mubr.f32.gmra.mrb[0].mxu0 %v1467
      %v1550 = vpop.f32.mrb[0].mxu0
      %v1551 = vadd.f32 0.0, %v1550
      %v1552 = vpop.f32.mrb[0].mxu0
      %v1553 = vadd.f32 0.0, %v1552
      %1554 = vmatprep.mubr.f32.mxu0 0.0
      %1555 = vmatmul.mubr.f32.gmra.mrb[0].mxu0 %v1470
      %v1556 = vpop.f32.mrb[0].mxu0
      %v1557 = vadd.f32 0.0, %v1556
      %v1558 = vpop.f32.mrb[0].mxu0
      %v1559 = vadd.f32 0.0, %v1558
      %1560 = vmatprep.mubr.f32.mxu0 0.0
      %1561 = vmatmul.mubr.f32.gmra.mrb[0].mxu0 %v1473
      %v1562 = vpop.f32.mrb[0].mxu0
      %v1563 = vadd.f32 0.0, %v1562
      %v1564 = vpop.f32.mrb[0].mxu0
      %v1565 = vadd.f32 0.0, %v1564
      %1566 = vmatprep.mubr.f32.mxu0 0.0
      %1567 = vmatmul.mubr.f32.gmra.mrb[0].mxu0 %v1476
      %v1568 = vpop.f32.mrb[0].mxu0
      %v1569 = vadd.f32 0.0, %v1568
      %v1570 = vpop.f32.mrb[0].mxu0
      %v1571 = vadd.f32 0.0, %v1570
      %1572 = vdwg.mxu0
      %v1573 = vadd.f32 %v1443, %v1551
      %v1574 = vadd.f32 %v1444, %v1553
      %v1575 = vadd.f32 %v1445, %v1557
      %v1576 = vadd.f32 %v1446, %v1559
      %v1577 = vadd.f32 %v1447, %v1563
      %v1578 = vadd.f32 %v1448, %v1565
      %v1579 = vadd.f32 %v1449, %v1569
      %v1580 = vadd.f32 %v1450, %v1571
      %v1581 = vadd.f32 %v1573, %v1574
      %1582 = vadd.xlane.f32.xlu0 %v1581
      %v1583 = vpop.xlane.xlu0 %1582
      %v1584 = vadd.f32 %v1575, %v1576
      %1585 = vadd.xlane.f32.xlu0 %v1584
      %v1586 = vpop.xlane.xlu0 %1585
      %v1587 = vadd.f32 %v1577, %v1578
      %1588 = vadd.xlane.f32.xlu0 %v1587
      %v1589 = vpop.xlane.xlu0 %1588
      %v1590 = vadd.f32 %v1579, %v1580
      %1591 = vadd.xlane.f32.xlu0 %v1590
      %v1592 = vpop.xlane.xlu0 %1591
      %1593 = vst.msk [vmem:[%s377] sm:$0xff] %vm441, %v1583
      %1594 = vst.msk [vmem:[%s377 + $0x8] sm:$0xff] %vm441, %v1586
      %1595 = vst.msk [vmem:[%s377 + $0x10] sm:$0xff] %vm441, %v1589
      %1596 = vst.msk [vmem:[%s377 + $0x18] sm:$0xff] %vm441, %v1592
      %v1597 = vmul.f32 %v1573, %v1573
      %v1598 = vmul.f32 %v1574, %v1574
      %v1599 = vmul.f32 %v1575, %v1575
      %v1600 = vmul.f32 %v1576, %v1576
      %v1601 = vmul.f32 %v1577, %v1577
      %v1602 = vmul.f32 %v1578, %v1578
      %v1603 = vmul.f32 %v1579, %v1579
      %v1604 = vmul.f32 %v1580, %v1580
      %v1605 = vadd.f32 %v1597, %v1598
      %1606 = vadd.xlane.f32.xlu0 %v1605
      %v1607 = vpop.xlane.xlu0 %1606
      %v1608 = vadd.f32 %v1599, %v1600
      %1609 = vadd.xlane.f32.xlu0 %v1608
      %v1610 = vpop.xlane.xlu0 %1609
      %v1611 = vadd.f32 %v1601, %v1602
      %1612 = vadd.xlane.f32.xlu0 %v1611
      %v1613 = vpop.xlane.xlu0 %1612
      %v1614 = vadd.f32 %v1603, %v1604
      %1615 = vadd.xlane.f32.xlu0 %v1614
      %v1616 = vpop.xlane.xlu0 %1615
      %1617 = vst.msk [vmem:[%s390] sm:$0xff] %vm441, %v1607
      %1618 = vst.msk [vmem:[%s390 + $0x8] sm:$0xff] %vm441, %v1610
      %1619 = vst.msk [vmem:[%s390 + $0x10] sm:$0xff] %vm441, %v1613
      %1620 = vst.msk [vmem:[%s390 + $0x18] sm:$0xff] %vm441, %v1616
      %p1621 = scmp.lt.s32.totalorder %s22, 1
      %s1622 = scalar_select %p1621, %s22, 1
      %p1623 = scmp.lt.s32.totalorder %s23, 0
      %s1624 = scalar_select %p1623, %s23, 0
      %p1625 = scmp.lt.s32.totalorder %s24, 0
      %s1626 = scalar_select %p1625, %s24, 0
      %s1627 = smul.addr %s1626, 4
      %s1628 = smul.addr %s1624, 4
      %s1629 = sadd.s32 %s1627, %s1628
      %s1630 = smul.addr %s1622, 4
      %s1631 = sadd.s32 %s1629, %s1630
      %s1632 = smul.addr %s1631, 8
      %s1633 = scalar_lea.vmem %s4, %s1632
      %p1634 = scmp.lt.s32.totalorder %s22, 1
      %s1635 = scalar_select %p1634, %s22, 1
      %p1636 = scmp.lt.s32.totalorder %s23, 0
      %s1637 = scalar_select %p1636, %s23, 0
      %p1638 = scmp.lt.s32.totalorder %s24, 0
      %s1639 = scalar_select %p1638, %s24, 0
      %s1640 = smul.addr %s1639, 4
      %s1641 = smul.addr %s1637, 4
      %s1642 = sadd.s32 %s1640, %s1641
      %s1643 = smul.addr %s1635, 4
      %s1644 = sadd.s32 %s1642, %s1643
      %s1645 = smul.addr %s1644, 8
      %s1646 = scalar_lea.vmem %s5, %s1645
      // Predicated region
      $region37: #{tpu_custom_call.1} parent=35 // pred_check
        %p1647 = pneg %p168
      $region38: #{tpu_custom_call.1} parent=35 // pred_check_branch
        %1649 = sbr.rel (%p1647) target = $region40
      $region39: #{tpu_custom_call.1} parent=35 // pred_region
        _
      $region40: #{tpu_custom_call.1} parent=35 // pred_fallthru
        _
      // Predicated region
      $region41: #{tpu_custom_call.1} parent=35 // pred_check
        %p1650 = pneg %p198
      $region42: #{tpu_custom_call.1} parent=35 // pred_check_branch
        %1652 = sbr.rel (%p1650) target = $region44
      $region43: #{tpu_custom_call.1} parent=35 // pred_region
        _
      $region44: #{tpu_custom_call.1} parent=35 // pred_fallthru
        _
    $region36: #{tpu_custom_call.1} parent=5 // pred_fallthru
      _
    %p1653 = scmp.le.s32.totalorder 2, %s12
    // Predicated region
    $region45: #{tpu_custom_call.1} parent=5 // pred_check
      %p1654 = pneg %p1653
    $region46: #{tpu_custom_call.1} parent=5 // pred_check_branch
      %1656 = sbr.rel (%p1654) target = $region48
    $region47: #{tpu_custom_call.1} parent=5 // pred_region
      %s1657 = ssub.s32 %s12, 2
      // Predicated region
      $region49: #{tpu_custom_call.1} parent=47 // pred_check
        %p1658 = pneg %p174
      $region50: #{tpu_custom_call.1} parent=47 // pred_check_branch
        %1660 = sbr.rel (%p1658) target = $region52
      $region51: #{tpu_custom_call.1} parent=47 // pred_region
        %p1661 = scmp.lt.s32.totalorder %s25, 1
        %s1662 = scalar_select %p1661, %s25, 1
        %p1663 = scmp.lt.s32.totalorder %s26, 0
        %s1664 = scalar_select %p1663, %s26, 0
        %p1665 = scmp.lt.s32.totalorder %s27, 0
        %s1666 = scalar_select %p1665, %s27, 0
        %s1667 = smul.addr %s1666, 4
        %s1668 = smul.addr %s1664, 4
        %s1669 = sadd.s32 %s1667, %s1668
        %s1670 = smul.addr %s1662, 4
        %s1671 = sadd.s32 %s1669, %s1670
        %s1672 = smul.addr %s1671, 8
        %s1673 = scalar_lea.vmem %s4, %s1672
      $region52: #{tpu_custom_call.1} parent=47 // pred_fallthru
        _
      // Predicated region
      $region53: #{tpu_custom_call.1} parent=47 // pred_check
        %p1674 = pneg %p204
      $region54: #{tpu_custom_call.1} parent=47 // pred_check_branch
        %1676 = sbr.rel (%p1674) target = $region56
      $region55: #{tpu_custom_call.1} parent=47 // pred_region
        %p1677 = scmp.lt.s32.totalorder %s25, 1
        %s1678 = scalar_select %p1677, %s25, 1
        %p1679 = scmp.lt.s32.totalorder %s26, 0
        %s1680 = scalar_select %p1679, %s26, 0
        %p1681 = scmp.lt.s32.totalorder %s27, 0
        %s1682 = scalar_select %p1681, %s27, 0
        %s1683 = smul.addr %s1682, 4
        %s1684 = smul.addr %s1680, 4
        %s1685 = sadd.s32 %s1683, %s1684
        %s1686 = smul.addr %s1678, 4
        %s1687 = sadd.s32 %s1685, %s1686
        %s1688 = smul.addr %s1687, 8
        %s1689 = scalar_lea.vmem %s5, %s1688
      $region56: #{tpu_custom_call.1} parent=47 // pred_fallthru
        _
    $region48: #{tpu_custom_call.1} parent=5 // pred_fallthru
      _
  $region6: #{tpu_custom_call.1} parent=0 // loop_footer
    %s16 = sadd.s32 1, %s12
  $region7: #{tpu_custom_call.1} parent=0 // loop_footer_branch
    %11 = sbr.rel target = $region3
  $region8: #{tpu_custom_call.1} parent=0 // loop_exit
    _

</llo_original>
